<compile_context>
chip_gen: v6e
topology: v6e:2x2x1
jax: 0.10.0
libtpu: 0.0.40
codegen_flags: <defaults>
</compile_context>

<pallas_src>
import functools
import math

import jax
import jax.numpy as jnp
from jax.experimental import pallas as pl
from jax.experimental.pallas import tpu as pltpu


# ---------------------------------------------------------------------------
# helpers
# ---------------------------------------------------------------------------
def _gelu_tanh(x):
    c = math.sqrt(2.0 / math.pi)
    return 0.5 * x * (1.0 + jnp.tanh(c * (x + 0.044715 * x * x * x)))


# ---------------------------------------------------------------------------
# Fused kernel: base MLP reduction over the 32x hidden axis + Matryoshka head.
#   grid = (batch tiles [parallel], hidden tiles [arbitrary / reduction])
#   Head (slices + quantization + half-bit FFN) runs at the last reduction step
#   directly on the VMEM-resident accumulator.
# ---------------------------------------------------------------------------
def _fused_kernel(x_ref, w1_ref, b1_ref, w2_ref, b2_ref,
                  thr2_ref, thr15_ref, thr1_ref,
                  hw1_ref, hb1_ref, hw2_ref, hb2_ref, thrh_ref,
                  y_ref, q_ref, half_ref,
                  acc_ref, *, d2, d15, d1, dh):
    k = pl.program_id(1)

    @pl.when(k == 0)
    def _():
        acc_ref[...] = jnp.zeros_like(acc_ref)

    # base_transform partial: x @ W1[:, k-tile] -> GELU -> @ W2[k-tile, :]
    h = jnp.dot(x_ref[...], w1_ref[...], preferred_element_type=jnp.float32)
    h = _gelu_tanh(h + b1_ref[...])
    acc_ref[...] += jnp.dot(h, w2_ref[...], preferred_element_type=jnp.float32)

    @pl.when(k == pl.num_programs(1) - 1)
    def _():
        y = acc_ref[...] + b2_ref[...]
        y_ref[...] = y.astype(y_ref.dtype)

        off = 0

        # 2-bit segment (4 levels -> sum of 3 sorted-threshold indicators)
        seg2 = y[:, off:off + d2]
        off += d2
        thr2 = thr2_ref[...]
        q2 = jnp.zeros_like(seg2)
        for t in range(3):
            q2 = q2 + (seg2 > thr2[t:t + 1, :]).astype(seg2.dtype)

        # 1.5-bit segment (3 levels -> sum of 2 sorted-threshold indicators)
        seg15 = y[:, off:off + d15]
        off += d15
        thr15 = thr15_ref[...]
        q15 = jnp.zeros_like(seg15)
        for t in range(2):
            q15 = q15 + (seg15 > thr15[t:t + 1, :]).astype(seg15.dtype)

        # 1-bit segment (binary)
        seg1 = y[:, off:off + d1]
        off += d1
        q1 = (seg1 > thr1_ref[...]).astype(seg1.dtype)

        # half-bit segment: Linear -> GELU -> Linear, then binary quantization
        segh = y[:, off:off + dh]
        hmid = jnp.dot(segh, hw1_ref[...], preferred_element_type=jnp.float32) + hb1_ref[...]
        hmid = _gelu_tanh(hmid)
        half = jnp.dot(hmid, hw2_ref[...], preferred_element_type=jnp.float32) + hb2_ref[...]
        half_ref[...] = half.astype(half_ref.dtype)
        qh = (half > thrh_ref[...]).astype(half.dtype)

        # single wide (lane-dense) store of every quantized segment
        q_ref[...] = jnp.concatenate([q2, q15, q1, qh], axis=1).astype(q_ref.dtype)


def matryoshka_fused(x, w1, b1, w2, b2, thr2_t, thr15_t, thr1_t,
                     hw1, hb1, hw2, hb2, thrh_t,
                     *, d2, d15, d1, dh, batch_tile=8, hidden_tile=256):
    B, D = x.shape
    H = w1.shape[1]
    dr = hw1.shape[1]
    dq = d2 + d15 + d1 + dr

    batch_tile = min(batch_tile, B)
    hidden_tile = min(hidden_tile, H)
    assert B % batch_tile == 0 and H % hidden_tile == 0
    assert d2 + d15 + d1 + dh <= D

    kernel = functools.partial(_fused_kernel, d2=d2, d15=d15, d1=d1, dh=dh)

    def const(shape):
        return pl.BlockSpec(shape, lambda i, k: (0, 0))

    def row(width):
        return pl.BlockSpec((batch_tile, width), lambda i, k: (i, 0))

    out_shape = (
        jax.ShapeDtypeStruct((B, D), x.dtype),    # y (post base_transform)
        jax.ShapeDtypeStruct((B, dq), x.dtype),   # all quantized segments, concatenated
        jax.ShapeDtypeStruct((B, dr), x.dtype),   # half-bit FFN output (non-quantized)
    )

    return pl.pallas_call(
        kernel,
        out_shape=out_shape,
        grid_spec=pltpu.PrefetchScalarGridSpec(
            num_scalar_prefetch=0,
            grid=(B // batch_tile, H // hidden_tile),
            in_specs=[
                pl.BlockSpec((batch_tile, D), lambda i, k: (i, 0)),     # x
                pl.BlockSpec((D, hidden_tile), lambda i, k: (0, k)),    # w1
                pl.BlockSpec((1, hidden_tile), lambda i, k: (0, k)),    # b1
                pl.BlockSpec((hidden_tile, D), lambda i, k: (k, 0)),    # w2
                const(b2.shape),
                const(thr2_t.shape),
                const(thr15_t.shape),
                const(thr1_t.shape),
                const(hw1.shape),
                const(hb1.shape),
                const(hw2.shape),
                const(hb2.shape),
                const(thrh_t.shape),
            ],
            out_specs=[row(D), row(dq), row(dr)],
            scratch_shapes=[pltpu.VMEM((batch_tile, D), jnp.float32)],
        ),
        compiler_params=pltpu.CompilerParams(
            dimension_semantics=("parallel", "arbitrary"),
            vmem_limit_bytes=32 * 1024 * 1024,
        ),
    )(x, w1, b1, w2, b2, thr2_t, thr15_t, thr1_t, hw1, hb1, hw2, hb2, thrh_t)


# ---------------------------------------------------------------------------
# Full forward (mirrors CustomizedMatryoshkaTransformer.forward; expand=False,
# enable_matryoshka_training assumed True so the base MLP is applied).
# ---------------------------------------------------------------------------
def matryoshka_forward(x, params, cfg, *, batch_tile=8, hidden_tile=256):
    d2, d15, d1, dh = (cfg["two_bits"], cfg["one_and_half_bits"],
                       cfg["one_bits"], cfg["half_bits"])
    assert min(d2, d15, d1, dh) > 0, "this implementation assumes all segments > 0"
    dr = dh // 2
    assert dr > 0

    # Sort multi-level thresholds (torch.sort(self.thresholds, dim=1)) and lay
    # them out as (num_thresholds, dim) so each row broadcasts along lanes.
    thr2_t = jnp.sort(params["thr2"], axis=1).T
    thr15_t = jnp.sort(params["thr15"], axis=1).T
    thr1_t = params["thr1"].T
    thrh_t = params["thrh"].T

    y, q_all, half_seg = matryoshka_fused(
        x, params["w1"], params["b1"], params["w2"], params["b2"],
        thr2_t, thr15_t, thr1_t,
        params["hw1"], params["hb1"], params["hw2"], params["hb2"], thrh_t,
        d2=d2, d15=d15, d1=d1, dh=dh,
        batch_tile=batch_tile, hidden_tile=hidden_tile)

    # Dict assembly (cumulative concatenations) == pure slicing of the slab.
    embeddings_dict = {}
    non_quant_embeddings = {}

    cum = d2
    embeddings_dict[cum] = q_all[:, :cum]
    non_quant_embeddings[cum] = y[:, :d2]

    cum += d15
    embeddings_dict[cum] = q_all[:, :cum]
    non_quant_embeddings[cum] = y[:, d2:d2 + d15]

    cum += d1
    embeddings_dict[cum] = q_all[:, :cum]
    non_quant_embeddings[cum] = y[:, d2 + d15:d2 + d15 + d1]

    cum += dr
    embeddings_dict[cum] = q_all[:, :cum]
    non_quant_embeddings[cum] = half_seg

    return embeddings_dict, non_quant_embeddings


# ---------------------------------------------------------------------------
# demo / self-check
# ---------------------------------------------------------------------------
if __name__ == "__main__":
    key = jax.random.PRNGKey(0)
    ks = jax.random.split(key, 12)

    B = 16
    input_dim = 32
    cfg = dict(two_bits=8, one_and_half_bits=8, one_bits=8, half_bits=8)
    d2, d15, d1, dh = (cfg["two_bits"], cfg["one_and_half_bits"],
                       cfg["one_bits"], cfg["half_bits"])
    dr = dh // 2
    hidden = input_dim * 32

    x = jax.random.normal(ks[0], (B, input_dim), jnp.float32)

    params = dict(
        w1=jax.random.normal(ks[1], (input_dim, hidden), jnp.float32) * (2.0 / input_dim) ** 0.5,
        b1=jnp.zeros((1, hidden), jnp.float32),
        w2=jax.random.normal(ks[2], (hidden, input_dim), jnp.float32) * (2.0 / hidden) ** 0.5,
        b2=jnp.zeros((1, input_dim), jnp.float32),
        hw1=jax.random.normal(ks[3], (dh, dr), jnp.float32) * (1.0 / dh) ** 0.5,
        hb1=jax.random.normal(ks[4], (1, dr), jnp.float32) * 0.1,
        hw2=jax.random.normal(ks[5], (dr, dr), jnp.float32) * (1.0 / dr) ** 0.5,
        hb2=jax.random.normal(ks[6], (1, dr), jnp.float32) * 0.1,
        thr2=jax.random.normal(ks[7], (d2, 3), jnp.float32) * 0.5,
        thr15=jax.random.normal(ks[8], (d15, 2), jnp.float32) * 0.5,
        thr1=jax.random.normal(ks[9], (d1, 1), jnp.float32) * 0.5,
        thrh=jax.random.normal(ks[10], (dr, 1), jnp.float32) * 0.5,
    )

    emb_dict, non_quant = matryoshka_forward(x, params, cfg)
    (emb_dict, non_quant) = jax.block_until_ready((emb_dict, non_quant))

    # ---------------- pure-JAX reference checks ----------------
    hp = jax.lax.Precision.HIGHEST
    y_ref = jnp.dot(_gelu_tanh(jnp.dot(x, params["w1"], precision=hp) + params["b1"]),
                    params["w2"], precision=hp) + params["b2"]
    y_kernel = non_quant[d2]  # first dr slice is a view of kernel y
    # Recover the full kernel y from the non_quant dict + a direct slab check.
    y_full = jnp.concatenate(
        [non_quant[d2], non_quant[d2 + d15], non_quant[d2 + d15 + d1]], axis=1)
    assert jnp.allclose(y_full, y_ref[:, :d2 + d15 + d1], atol=2e-3, rtol=2e-3), "base MLP mismatch"

    def multi_quant(seg, thr_sorted_t):
        q = jnp.zeros_like(seg)
        for t in range(thr_sorted_t.shape[0]):
            q = q + (seg > thr_sorted_t[t:t + 1, :]).astype(seg.dtype)
        return q

    thr2_t = jnp.sort(params["thr2"], axis=1).T
    thr15_t = jnp.sort(params["thr15"], axis=1).T
    q2_ref = multi_quant(non_quant[d2], thr2_t)
    q15_ref = multi_quant(non_quant[d2 + d15], thr15_t)
    q1_ref = (non_quant[d2 + d15 + d1] > params["thr1"].T).astype(jnp.float32)

    assert jnp.array_equal(emb_dict[d2], q2_ref), "2-bit quantization mismatch"
    assert jnp.array_equal(emb_dict[d2 + d15][:, d2:], q15_ref), "1.5-bit quantization mismatch"
    assert jnp.array_equal(emb_dict[d2 + d15 + d1][:, d2 + d15:], q1_ref), "1-bit quantization mismatch"

    # half-bit FFN reference (computed from the kernel's y so the comparison is exact-path)
    seg_h_ref = y_ref[:, d2 + d15 + d1:d2 + d15 + d1 + dh]
    half_ref_ref = jnp.dot(_gelu_tanh(jnp.dot(seg_h_ref, params["hw1"], precision=hp) + params["hb1"]),
                           params["hw2"], precision=hp) + params["hb2"]
    half_seg = non_quant[d2 + d15 + d1 + dr]
    assert jnp.allclose(half_seg, half_ref_ref, atol=2e-3, rtol=2e-3), "half-bit FFN mismatch"
    qh_expected = (half_seg > params["thrh"].T).astype(jnp.float32)
    assert jnp.array_equal(emb_dict[d2 + d15 + d1 + dr][:, d2 + d15 + d1:], qh_expected), "half-bit quant mismatch"

    # cumulative-concatenation structure checks
    assert emb_dict[d2 + d15 + d1 + dr].shape == (B, d2 + d15 + d1 + dr)
    assert jnp.array_equal(emb_dict[d2 + d15][:, :d2], emb_dict[d2])
    assert jnp.array_equal(emb_dict[d2 + d15 + d1][:, :d2 + d15], emb_dict[d2 + d15])

    print("KERNEL_OK")
</pallas_src>

<mosaic_0001>
module attributes {stable_mosaic.version = 11 : i64} {
  func.func @_fused_kernel(%arg0: i32, %arg1: i32, %arg2: memref<8x32xf32, #tpu.memory_space<vmem>>, %arg3: memref<32x256xf32, #tpu.memory_space<vmem>>, %arg4: memref<1x256xf32, #tpu.memory_space<vmem>>, %arg5: memref<256x32xf32, #tpu.memory_space<vmem>>, %arg6: memref<1x32xf32, #tpu.memory_space<vmem>>, %arg7: memref<3x8xf32, #tpu.memory_space<vmem>>, %arg8: memref<2x8xf32, #tpu.memory_space<vmem>>, %arg9: memref<1x8xf32, #tpu.memory_space<vmem>>, %arg10: memref<8x4xf32, #tpu.memory_space<vmem>>, %arg11: memref<1x4xf32, #tpu.memory_space<vmem>>, %arg12: memref<4x4xf32, #tpu.memory_space<vmem>>, %arg13: memref<1x4xf32, #tpu.memory_space<vmem>>, %arg14: memref<1x4xf32, #tpu.memory_space<vmem>>, %arg15: memref<8x32xf32, #tpu.memory_space<vmem>>, %arg16: memref<8x28xf32, #tpu.memory_space<vmem>>, %arg17: memref<8x4xf32, #tpu.memory_space<vmem>>, %arg18: memref<8x32xf32, #tpu.memory_space<vmem>>) attributes {dimension_semantics = [#tpu.dimension_semantics<parallel>, #tpu.dimension_semantics<arbitrary>], iteration_bounds = array<i64: 2, 4>, scalar_prefetch = 0 : i64, scratch_operands = 1 : i64, tpu.core_type = #tpu.core_type<tc>, window_params = [{transform_indices = @transform_0, window_bounds = array<i64: 8, 32>}, {transform_indices = @transform_1, window_bounds = array<i64: 32, 256>}, {transform_indices = @transform_2, window_bounds = array<i64: 1, 256>}, {transform_indices = @transform_3, window_bounds = array<i64: 256, 32>}, {pipeline_mode = #tpu.pipeline_mode<synchronous>, transform_indices = @transform_4, window_bounds = array<i64: 1, 32>}, {pipeline_mode = #tpu.pipeline_mode<synchronous>, transform_indices = @transform_5, window_bounds = array<i64: 3, 8>}, {pipeline_mode = #tpu.pipeline_mode<synchronous>, transform_indices = @transform_6, window_bounds = array<i64: 2, 8>}, {pipeline_mode = #tpu.pipeline_mode<synchronous>, transform_indices = @transform_7, window_bounds = array<i64: 1, 8>}, {pipeline_mode = #tpu.pipeline_mode<synchronous>, transform_indices = @transform_8, window_bounds = array<i64: 8, 4>}, {pipeline_mode = #tpu.pipeline_mode<synchronous>, transform_indices = @transform_9, window_bounds = array<i64: 1, 4>}, {pipeline_mode = #tpu.pipeline_mode<synchronous>, transform_indices = @transform_10, window_bounds = array<i64: 4, 4>}, {pipeline_mode = #tpu.pipeline_mode<synchronous>, transform_indices = @transform_11, window_bounds = array<i64: 1, 4>}, {pipeline_mode = #tpu.pipeline_mode<synchronous>, transform_indices = @transform_12, window_bounds = array<i64: 1, 4>}, {transform_indices = @transform_13, window_bounds = array<i64: 8, 32>}, {transform_indices = @transform_14, window_bounds = array<i64: 8, 28>}, {transform_indices = @transform_15, window_bounds = array<i64: 8, 4>}]} {
    %c0_i32 = arith.constant 0 : i32
    %0 = arith.cmpi eq, %arg1, %c0_i32 : i32
    %1 = arith.extui %0 : i1 to i32
    %c0_i32_0 = arith.constant 0 : i32
    %2 = arith.cmpi ne, %1, %c0_i32_0 : i32
    scf.if %2 {
      %cst_18 = arith.constant 0.000000e+00 : f32
      %30 = vector.broadcast %cst_18 : f32 to vector<8x32xf32>
      %c0_19 = arith.constant 0 : index
      %c0_20 = arith.constant 0 : index
      %31 = vector.load %arg18[%c0_19, %c0_20] : memref<8x32xf32, #tpu.memory_space<vmem>>, vector<8x32xf32>
      tpu.vector_store %arg18[%c0_19, %c0_20], %30 {strides = array<i32>} : memref<8x32xf32, #tpu.memory_space<vmem>>, vector<8x32xf32>,
    } else {
    }
    %c0 = arith.constant 0 : index
    %c0_1 = arith.constant 0 : index
    %3 = vector.load %arg2[%c0, %c0_1] : memref<8x32xf32, #tpu.memory_space<vmem>>, vector<8x32xf32>
    %c0_2 = arith.constant 0 : index
    %c0_3 = arith.constant 0 : index
    %4 = vector.load %arg3[%c0_2, %c0_3] : memref<32x256xf32, #tpu.memory_space<vmem>>, vector<32x256xf32>
    %cst = arith.constant dense<0.000000e+00> : vector<8x256xf32>
    %5 = tpu.matmul %3, %4, %cst {dimension_numbers = #tpu.dot_dimension_numbers<[1], [0], [0], [1], [0, 0, 1, 1], [], []>} : vector<8x32xf32>, vector<32x256xf32>, vector<8x256xf32> -> vector<8x256xf32>
    %c0_4 = arith.constant 0 : index
    %c0_5 = arith.constant 0 : index
    %6 = vector.load %arg4[%c0_4, %c0_5] : memref<1x256xf32, #tpu.memory_space<vmem>>, vector<1x256xf32>
    %7 = vector.broadcast %6 : vector<1x256xf32> to vector<8x256xf32>
    %8 = arith.addf %5, %7 : vector<8x256xf32>
    %cst_6 = arith.constant 5.000000e-01 : f32
    %9 = vector.broadcast %cst_6 : f32 to vector<8x256xf32>
    %10 = arith.mulf %9, %8 : vector<8x256xf32>
    %cst_7 = arith.constant 4.471500e-02 : f32
    %11 = vector.broadcast %cst_7 : f32 to vector<8x256xf32>
    %12 = arith.mulf %11, %8 : vector<8x256xf32>
    %13 = arith.mulf %12, %8 : vector<8x256xf32>
    %14 = arith.mulf %13, %8 : vector<8x256xf32>
    %15 = arith.addf %8, %14 : vector<8x256xf32>
    %cst_8 = arith.constant 0.797884583 : f32
    %16 = vector.broadcast %cst_8 : f32 to vector<8x256xf32>
    %17 = arith.mulf %16, %15 : vector<8x256xf32>
    %18 = math.tanh %17 : vector<8x256xf32>
    %cst_9 = arith.constant 1.000000e+00 : f32
    %19 = vector.broadcast %cst_9 : f32 to vector<8x256xf32>
    %20 = arith.addf %19, %18 : vector<8x256xf32>
    %21 = arith.mulf %10, %20 : vector<8x256xf32>
    %c0_10 = arith.constant 0 : index
    %c0_11 = arith.constant 0 : index
    %22 = vector.load %arg18[%c0_10, %c0_11] : memref<8x32xf32, #tpu.memory_space<vmem>>, vector<8x32xf32>
    %c0_12 = arith.constant 0 : index
    %c0_13 = arith.constant 0 : index
    %23 = vector.load %arg5[%c0_12, %c0_13] : memref<256x32xf32, #tpu.memory_space<vmem>>, vector<256x32xf32>
    %cst_14 = arith.constant dense<0.000000e+00> : vector<8x32xf32>
    %24 = tpu.matmul %21, %23, %cst_14 {dimension_numbers = #tpu.dot_dimension_numbers<[1], [0], [0], [1], [0, 0, 1, 1], [], []>} : vector<8x256xf32>, vector<256x32xf32>, vector<8x32xf32> -> vector<8x32xf32>
    %25 = arith.addf %22, %24 : vector<8x32xf32>
    %c0_15 = arith.constant 0 : index
    %c0_16 = arith.constant 0 : index
    %26 = vector.load %arg18[%c0_15, %c0_16] : memref<8x32xf32, #tpu.memory_space<vmem>>, vector<8x32xf32>
    tpu.vector_store %arg18[%c0_15, %c0_16], %25 {strides = array<i32>} : memref<8x32xf32, #tpu.memory_space<vmem>>, vector<8x32xf32>,
    %c3_i32 = arith.constant 3 : i32
    %27 = arith.cmpi eq, %arg1, %c3_i32 : i32
    %28 = arith.extui %27 : i1 to i32
    %c0_i32_17 = arith.constant 0 : i32
    %29 = arith.cmpi ne, %28, %c0_i32_17 : i32
    scf.if %29 {
      %c0_18 = arith.constant 0 : index
      %c0_19 = arith.constant 0 : index
      %30 = vector.load %arg18[%c0_18, %c0_19] : memref<8x32xf32, #tpu.memory_space<vmem>>, vector<8x32xf32>
      %c0_20 = arith.constant 0 : index
      %c0_21 = arith.constant 0 : index
      %31 = vector.load %arg6[%c0_20, %c0_21] : memref<1x32xf32, #tpu.memory_space<vmem>>, vector<1x32xf32>
      %32 = vector.broadcast %31 : vector<1x32xf32> to vector<8x32xf32>
      %33 = arith.addf %30, %32 : vector<8x32xf32>
      %c0_22 = arith.constant 0 : index
      %c0_23 = arith.constant 0 : index
      %34 = vector.load %arg15[%c0_22, %c0_23] : memref<8x32xf32, #tpu.memory_space<vmem>>, vector<8x32xf32>
      tpu.vector_store %arg15[%c0_22, %c0_23], %33 {strides = array<i32>} : memref<8x32xf32, #tpu.memory_space<vmem>>, vector<8x32xf32>,
      %35 = vector.extract_strided_slice %33 {offsets = [0, 0], sizes = [8, 8], strides = [1, 1]} : vector<8x32xf32> to vector<8x8xf32>
      %c0_24 = arith.constant 0 : index
      %c0_25 = arith.constant 0 : index
      %36 = vector.load %arg7[%c0_24, %c0_25] : memref<3x8xf32, #tpu.memory_space<vmem>>, vector<3x8xf32>
      %cst_26 = arith.constant 0.000000e+00 : f32
      %37 = vector.broadcast %cst_26 : f32 to vector<8x8xf32>
      %38 = vector.extract_strided_slice %36 {offsets = [0, 0], sizes = [1, 8], strides = [1, 1]} : vector<3x8xf32> to vector<1x8xf32>
      %39 = vector.broadcast %38 : vector<1x8xf32> to vector<8x8xf32>
      %40 = arith.cmpf ogt, %35, %39 : vector<8x8xf32>
      %41 = arith.extui %40 : vector<8x8xi1> to vector<8x8xi32>
      %42 = arith.sitofp %41 : vector<8x8xi32> to vector<8x8xf32>
      %43 = arith.addf %37, %42 : vector<8x8xf32>
      %44 = vector.extract_strided_slice %36 {offsets = [1, 0], sizes = [1, 8], strides = [1, 1]} : vector<3x8xf32> to vector<1x8xf32>
      %45 = vector.broadcast %44 : vector<1x8xf32> to vector<8x8xf32>
      %46 = arith.cmpf ogt, %35, %45 : vector<8x8xf32>
      %47 = arith.extui %46 : vector<8x8xi1> to vector<8x8xi32>
      %48 = arith.sitofp %47 : vector<8x8xi32> to vector<8x8xf32>
      %49 = arith.addf %43, %48 : vector<8x8xf32>
      %50 = vector.extract_strided_slice %36 {offsets = [2, 0], sizes = [1, 8], strides = [1, 1]} : vector<3x8xf32> to vector<1x8xf32>
      %51 = vector.broadcast %50 : vector<1x8xf32> to vector<8x8xf32>
      %52 = arith.cmpf ogt, %35, %51 : vector<8x8xf32>
      %53 = arith.extui %52 : vector<8x8xi1> to vector<8x8xi32>
      %54 = arith.sitofp %53 : vector<8x8xi32> to vector<8x8xf32>
      %55 = arith.addf %49, %54 : vector<8x8xf32>
      %56 = vector.extract_strided_slice %33 {offsets = [0, 8], sizes = [8, 8], strides = [1, 1]} : vector<8x32xf32> to vector<8x8xf32>
      %c0_27 = arith.constant 0 : index
      %c0_28 = arith.constant 0 : index
      %57 = vector.load %arg8[%c0_27, %c0_28] : memref<2x8xf32, #tpu.memory_space<vmem>>, vector<2x8xf32>
      %cst_29 = arith.constant 0.000000e+00 : f32
      %58 = vector.broadcast %cst_29 : f32 to vector<8x8xf32>
      %59 = vector.extract_strided_slice %57 {offsets = [0, 0], sizes = [1, 8], strides = [1, 1]} : vector<2x8xf32> to vector<1x8xf32>
      %60 = vector.broadcast %59 : vector<1x8xf32> to vector<8x8xf32>
      %61 = arith.cmpf ogt, %56, %60 : vector<8x8xf32>
      %62 = arith.extui %61 : vector<8x8xi1> to vector<8x8xi32>
      %63 = arith.sitofp %62 : vector<8x8xi32> to vector<8x8xf32>
      %64 = arith.addf %58, %63 : vector<8x8xf32>
      %65 = vector.extract_strided_slice %57 {offsets = [1, 0], sizes = [1, 8], strides = [1, 1]} : vector<2x8xf32> to vector<1x8xf32>
      %66 = vector.broadcast %65 : vector<1x8xf32> to vector<8x8xf32>
      %67 = arith.cmpf ogt, %56, %66 : vector<8x8xf32>
      %68 = arith.extui %67 : vector<8x8xi1> to vector<8x8xi32>
      %69 = arith.sitofp %68 : vector<8x8xi32> to vector<8x8xf32>
      %70 = arith.addf %64, %69 : vector<8x8xf32>
      %71 = vector.extract_strided_slice %33 {offsets = [0, 16], sizes = [8, 8], strides = [1, 1]} : vector<8x32xf32> to vector<8x8xf32>
      %c0_30 = arith.constant 0 : index
      %c0_31 = arith.constant 0 : index
      %72 = vector.load %arg9[%c0_30, %c0_31] : memref<1x8xf32, #tpu.memory_space<vmem>>, vector<1x8xf32>
      %73 = vector.broadcast %72 : vector<1x8xf32> to vector<8x8xf32>
      %74 = arith.cmpf ogt, %71, %73 : vector<8x8xf32>
      %75 = arith.extui %74 : vector<8x8xi1> to vector<8x8xi32>
      %76 = arith.sitofp %75 : vector<8x8xi32> to vector<8x8xf32>
      %77 = vector.extract_strided_slice %33 {offsets = [0, 24], sizes = [8, 8], strides = [1, 1]} : vector<8x32xf32> to vector<8x8xf32>
      %c0_32 = arith.constant 0 : index
      %c0_33 = arith.constant 0 : index
      %78 = vector.load %arg10[%c0_32, %c0_33] : memref<8x4xf32, #tpu.memory_space<vmem>>, vector<8x4xf32>
      %cst_34 = arith.constant dense<0.000000e+00> : vector<8x4xf32>
      %79 = tpu.matmul %77, %78, %cst_34 {dimension_numbers = #tpu.dot_dimension_numbers<[1], [0], [0], [1], [0, 0, 1, 1], [], []>} : vector<8x8xf32>, vector<8x4xf32>, vector<8x4xf32> -> vector<8x4xf32>
      %c0_35 = arith.constant 0 : index
      %c0_36 = arith.constant 0 : index
      %80 = vector.load %arg11[%c0_35, %c0_36] : memref<1x4xf32, #tpu.memory_space<vmem>>, vector<1x4xf32>
      %81 = vector.broadcast %80 : vector<1x4xf32> to vector<8x4xf32>
      %82 = arith.addf %79, %81 : vector<8x4xf32>
      %cst_37 = arith.constant 5.000000e-01 : f32
      %83 = vector.broadcast %cst_37 : f32 to vector<8x4xf32>
      %84 = arith.mulf %83, %82 : vector<8x4xf32>
      %cst_38 = arith.constant 4.471500e-02 : f32
      %85 = vector.broadcast %cst_38 : f32 to vector<8x4xf32>
      %86 = arith.mulf %85, %82 : vector<8x4xf32>
      %87 = arith.mulf %86, %82 : vector<8x4xf32>
      %88 = arith.mulf %87, %82 : vector<8x4xf32>
      %89 = arith.addf %82, %88 : vector<8x4xf32>
      %cst_39 = arith.constant 0.797884583 : f32
      %90 = vector.broadcast %cst_39 : f32 to vector<8x4xf32>
      %91 = arith.mulf %90, %89 : vector<8x4xf32>
      %92 = math.tanh %91 : vector<8x4xf32>
      %cst_40 = arith.constant 1.000000e+00 : f32
      %93 = vector.broadcast %cst_40 : f32 to vector<8x4xf32>
      %94 = arith.addf %93, %92 : vector<8x4xf32>
      %95 = arith.mulf %84, %94 : vector<8x4xf32>
      %c0_41 = arith.constant 0 : index
      %c0_42 = arith.constant 0 : index
      %96 = vector.load %arg12[%c0_41, %c0_42] : memref<4x4xf32, #tpu.memory_space<vmem>>, vector<4x4xf32>
      %cst_43 = arith.constant dense<0.000000e+00> : vector<8x4xf32>
      %97 = tpu.matmul %95, %96, %cst_43 {dimension_numbers = #tpu.dot_dimension_numbers<[1], [0], [0], [1], [0, 0, 1, 1], [], []>} : vector<8x4xf32>, vector<4x4xf32>, vector<8x4xf32> -> vector<8x4xf32>
      %c0_44 = arith.constant 0 : index
      %c0_45 = arith.constant 0 : index
      %98 = vector.load %arg13[%c0_44, %c0_45] : memref<1x4xf32, #tpu.memory_space<vmem>>, vector<1x4xf32>
      %99 = vector.broadcast %98 : vector<1x4xf32> to vector<8x4xf32>
      %100 = arith.addf %97, %99 : vector<8x4xf32>
      %c0_46 = arith.constant 0 : index
      %c0_47 = arith.constant 0 : index
      %101 = vector.load %arg17[%c0_46, %c0_47] : memref<8x4xf32, #tpu.memory_space<vmem>>, vector<8x4xf32>
      tpu.vector_store %arg17[%c0_46, %c0_47], %100 {strides = array<i32>} : memref<8x4xf32, #tpu.memory_space<vmem>>, vector<8x4xf32>,
      %c0_48 = arith.constant 0 : index
      %c0_49 = arith.constant 0 : index
      %102 = vector.load %arg14[%c0_48, %c0_49] : memref<1x4xf32, #tpu.memory_space<vmem>>, vector<1x4xf32>
      %103 = vector.broadcast %102 : vector<1x4xf32> to vector<8x4xf32>
      %104 = arith.cmpf ogt, %100, %103 : vector<8x4xf32>
      %105 = arith.extui %104 : vector<8x4xi1> to vector<8x4xi32>
      %106 = arith.sitofp %105 : vector<8x4xi32> to vector<8x4xf32>
      %107 = tpu.concatenate %55, %70, %76, %106 in 1 : vector<8x8xf32>, vector<8x8xf32>, vector<8x8xf32>, vector<8x4xf32> -> vector<8x28xf32>
      %c0_50 = arith.constant 0 : index
      %c0_51 = arith.constant 0 : index
      %108 = vector.load %arg16[%c0_50, %c0_51] : memref<8x28xf32, #tpu.memory_space<vmem>>, vector<8x28xf32>
      tpu.vector_store %arg16[%c0_50, %c0_51], %107 {strides = array<i32>} : memref<8x28xf32, #tpu.memory_space<vmem>>, vector<8x28xf32>,
    } else {
    }
    return
  }
  func.func @transform_0(%arg0: i32, %arg1: i32) -> (i32, i32) {
    %c0_i32 = arith.constant 0 : i32
    %c0_i32_0 = arith.constant 0 : i32
    return %arg0, %c0_i32 : i32, i32
  }
  func.func @transform_1(%arg0: i32, %arg1: i32) -> (i32, i32) {
    %c0_i32 = arith.constant 0 : i32
    %c0_i32_0 = arith.constant 0 : i32
    return %c0_i32, %arg1 : i32, i32
  }
  func.func @transform_2(%arg0: i32, %arg1: i32) -> (i32, i32) {
    %c0_i32 = arith.constant 0 : i32
    %c0_i32_0 = arith.constant 0 : i32
    return %c0_i32, %arg1 : i32, i32
  }
  func.func @transform_3(%arg0: i32, %arg1: i32) -> (i32, i32) {
    %c0_i32 = arith.constant 0 : i32
    %c0_i32_0 = arith.constant 0 : i32
    return %arg1, %c0_i32 : i32, i32
  }
  func.func @transform_4(%arg0: i32, %arg1: i32) -> (i32, i32) {
    %c0_i32 = arith.constant 0 : i32
    %c0_i32_0 = arith.constant 0 : i32
    %c0_i32_1 = arith.constant 0 : i32
    return %c0_i32, %c0_i32_0 : i32, i32
  }
  func.func @transform_5(%arg0: i32, %arg1: i32) -> (i32, i32) {
    %c0_i32 = arith.constant 0 : i32
    %c0_i32_0 = arith.constant 0 : i32
    %c0_i32_1 = arith.constant 0 : i32
    return %c0_i32, %c0_i32_0 : i32, i32
  }
  func.func @transform_6(%arg0: i32, %arg1: i32) -> (i32, i32) {
    %c0_i32 = arith.constant 0 : i32
    %c0_i32_0 = arith.constant 0 : i32
    %c0_i32_1 = arith.constant 0 : i32
    return %c0_i32, %c0_i32_0 : i32, i32
  }
  func.func @transform_7(%arg0: i32, %arg1: i32) -> (i32, i32) {
    %c0_i32 = arith.constant 0 : i32
    %c0_i32_0 = arith.constant 0 : i32
    %c0_i32_1 = arith.constant 0 : i32
    return %c0_i32, %c0_i32_0 : i32, i32
  }
  func.func @transform_8(%arg0: i32, %arg1: i32) -> (i32, i32) {
    %c0_i32 = arith.constant 0 : i32
    %c0_i32_0 = arith.constant 0 : i32
    %c0_i32_1 = arith.constant 0 : i32
    return %c0_i32, %c0_i32_0 : i32, i32
  }
  func.func @transform_9(%arg0: i32, %arg1: i32) -> (i32, i32) {
    %c0_i32 = arith.constant 0 : i32
    %c0_i32_0 = arith.constant 0 : i32
    %c0_i32_1 = arith.constant 0 : i32
    return %c0_i32, %c0_i32_0 : i32, i32
  }
  func.func @transform_10(%arg0: i32, %arg1: i32) -> (i32, i32) {
    %c0_i32 = arith.constant 0 : i32
    %c0_i32_0 = arith.constant 0 : i32
    %c0_i32_1 = arith.constant 0 : i32
    return %c0_i32, %c0_i32_0 : i32, i32
  }
  func.func @transform_11(%arg0: i32, %arg1: i32) -> (i32, i32) {
    %c0_i32 = arith.constant 0 : i32
    %c0_i32_0 = arith.constant 0 : i32
    %c0_i32_1 = arith.constant 0 : i32
    return %c0_i32, %c0_i32_0 : i32, i32
  }
  func.func @transform_12(%arg0: i32, %arg1: i32) -> (i32, i32) {
    %c0_i32 = arith.constant 0 : i32
    %c0_i32_0 = arith.constant 0 : i32
    %c0_i32_1 = arith.constant 0 : i32
    return %c0_i32, %c0_i32_0 : i32, i32
  }
  func.func @transform_13(%arg0: i32, %arg1: i32) -> (i32, i32) {
    %c0_i32 = arith.constant 0 : i32
    %c0_i32_0 = arith.constant 0 : i32
    return %arg0, %c0_i32 : i32, i32
  }
  func.func @transform_14(%arg0: i32, %arg1: i32) -> (i32, i32) {
    %c0_i32 = arith.constant 0 : i32
    %c0_i32_0 = arith.constant 0 : i32
    return %arg0, %c0_i32 : i32, i32
  }
  func.func @transform_15(%arg0: i32, %arg1: i32) -> (i32, i32) {
    %c0_i32 = arith.constant 0 : i32
    %c0_i32_0 = arith.constant 0 : i32
    return %arg0, %c0_i32 : i32, i32
  }
}

</mosaic_0001>

<llo_original>
// kernel: tpu_custom_call.1
$region0: #{tpu_custom_call.1}
  #allocation0 [shape = 'u32[]', space=smem, size = 0x4, offset = 0x4, fixed_abs, tag = 'smem constant byte address 0x4 - core index']
  #allocation1 [shape = 'u32[144,128]{1,0:T(1,128)}', space=vmem, size = 0x12000, scoped, tag = 'internal scratch']
  #allocation2 [shape = 'f32[8,32]{1,0:T(8,128)}', space=vmem, size = 0x1000, scoped, tag = 'scratch operand']
  %s0 = inlined_call_operand.vmem [shape: f32[16,32], index: 0, kind: input, shape index: {}]
  %s1 = inlined_call_operand.vmem [shape: f32[32,1024], index: 1, kind: input, shape index: {}]
  %s2 = inlined_call_operand.vmem [shape: f32[1,1024], index: 2, kind: input, shape index: {}]
  %s3 = inlined_call_operand.vmem [shape: f32[1024,32], index: 3, kind: input, shape index: {}]
  %s4 = inlined_call_operand.vmem [shape: f32[1,32], index: 4, kind: input, shape index: {}]
  %s5 = inlined_call_operand.vmem [shape: f32[3,8], index: 5, kind: input, shape index: {}]
  %s6 = inlined_call_operand.vmem [shape: f32[2,8], index: 6, kind: input, shape index: {}]
  %s7 = inlined_call_operand.vmem [shape: f32[1,8], index: 7, kind: input, shape index: {}]
  %s8 = inlined_call_operand.vmem [shape: f32[8,4], index: 8, kind: input, shape index: {}]
  %s9 = inlined_call_operand.vmem [shape: f32[1,4], index: 9, kind: input, shape index: {}]
  %s10 = inlined_call_operand.vmem [shape: f32[4,4], index: 10, kind: input, shape index: {}]
  %s11 = inlined_call_operand.vmem [shape: f32[1,4], index: 11, kind: input, shape index: {}]
  %s12 = inlined_call_operand.vmem [shape: f32[1,4], index: 12, kind: input, shape index: {}]
  %s13 = inlined_call_operand.hbm [shape: f32[16,32], index: 13, kind: output, shape index: {0}]
  %s14 = inlined_call_operand.hbm [shape: f32[16,28], index: 14, kind: output, shape index: {1}]
  %s15 = inlined_call_operand.vmem [shape: f32[16,4], index: 15, kind: output, shape index: {2}]
  %16 = xla_tuple %s13, %s14, %s15
  %s17 = sld [smem:[#allocation0]]
  $region132: #{tpu_custom_call.1} parent=0
    _
  %s19 = ssub.s32 1, %s17
  %s20 = scalar_select 0, %s19, %s17
  $region1: #{tpu_custom_call.1} parent=0
    #allocation3 [shape = 'u8[65536]{0}', space=vmem, size = 0x10000, scoped, tag = 'input window, operand 1']
    #allocation4 [shape = 'u8[8192]{0}', space=vmem, size = 0x2000, scoped, tag = 'output window, operand 0']
    #allocation5 [shape = 's32[2]{0}', space=sflag, size = 0x8, scoped, tag = 'scoped memory for tpu_custom_call.1']
    #allocation6 [shape = 'u8[8192]{0}', space=vmem, size = 0x2000, scoped, tag = 'output window, operand 1']
    #allocation7 [shape = 's32[2]{0}', space=sflag, size = 0x8, scoped, tag = 'scoped memory for tpu_custom_call.1']
    %21 = vsyncpa [#allocation5], 0
    %s22 = scalar_lea.sflag [#allocation5], 1
    %23 = vsyncpa %s22, 0
    %24 = vsyncpa [#allocation7], 0
    %s25 = scalar_lea.sflag [#allocation7], 1
    %26 = vsyncpa %s25, 0
    loop: start=0, step=1, limit=10
    $region2: #{tpu_custom_call.1} parent=1 // loop_pre_header
      _
    $region3: #{tpu_custom_call.1} parent=1 // loop_header
      %s28 = sphi 0, %s32
      %p29 = scmp.ge.s32.totalorder %s28, 10
      %s35 = sphi 0, %s47
      %s36 = sphi 0, %s43
      %s37 = sphi 0, %s35
      %s38 = sphi 0, %s36
      %s39 = sphi 0, %s37
      %s40 = sphi 0, %s38
      %s50 = sphi 0, %s52
      %s53 = sphi 0, %s50
      %s54 = sphi 0, %s53
      %s70 = sphi 0, %s54
      %s76 = sphi 0, %s78
      %s79 = sphi 0, %s76
      %s80 = sphi 0, %s79
      %s96 = sphi 0, %s80
      %s102 = sphi 0, %s104
      %s105 = sphi 0, %s102
      %s106 = sphi 0, %s105
      %s122 = sphi 0, %s106
      %s128 = sphi 0, %s130
      %s131 = sphi 0, %s128
      %s132 = sphi 0, %s131
      %s148 = sphi 0, %s132
      %s152 = sphi 0, %s152
      %s154 = sphi 0, %s152
      %s155 = sphi 0, %s154
      %s169 = sphi 0, %s155
      %s173 = sphi 0, %s173
      %s175 = sphi 0, %s173
      %s176 = sphi 0, %s175
      %s190 = sphi 0, %s176
      %s194 = sphi 0, %s194
      %s196 = sphi 0, %s194
      %s197 = sphi 0, %s196
      %s211 = sphi 0, %s197
      %s215 = sphi 0, %s215
      %s217 = sphi 0, %s215
      %s218 = sphi 0, %s217
      %s232 = sphi 0, %s218
      %s236 = sphi 0, %s236
      %s238 = sphi 0, %s236
      %s239 = sphi 0, %s238
      %s253 = sphi 0, %s239
      %s257 = sphi 0, %s257
      %s259 = sphi 0, %s257
      %s260 = sphi 0, %s259
      %s274 = sphi 0, %s260
      %s278 = sphi 0, %s278
      %s280 = sphi 0, %s278
      %s281 = sphi 0, %s280
      %s295 = sphi 0, %s281
      %s299 = sphi 0, %s299
      %s301 = sphi 0, %s299
      %s302 = sphi 0, %s301
      %s316 = sphi 0, %s302
      %s320 = sphi 0, %s320
      %s322 = sphi 0, %s320
      %s323 = sphi 0, %s322
      %s337 = sphi 0, %s323
      %s343 = sphi 0, %s345
      %s346 = sphi 0, %s343
      %s347 = sphi 0, %s346
      %s363 = sphi 0, %s347
      %s369 = sphi 0, %s371
      %s372 = sphi 0, %s369
      %s373 = sphi 0, %s372
      %s389 = sphi 0, %s373
      %s395 = sphi 0, %s397
      %s398 = sphi 0, %s395
      %s399 = sphi 0, %s398
      %s415 = sphi 0, %s399
    $region4: #{tpu_custom_call.1} parent=1 // loop_header_branch
      %31 = sbr.rel (%p29) target = $region8
    $region5: #{tpu_custom_call.1} parent=1 // loop_body
      %s33 = ssub.s32 %s28, 1
      %s34 = ssub.s32 %s28, 2
      %s41 = sadd.s32 1, %s36
      %p42 = scmp.ge.s32.totalorder %s41, 4
      %s43 = scalar_select %p42, 0, %s41
      %s44 = sadd.s32 1, %s35
      %s45 = scalar_select %p42, %s44, %s35
      %p46 = scmp.ge.s32.totalorder %s45, 2
      %s47 = scalar_select %p46, 0, %s45
      %s48 = ssub.s32 %s35, %s47
      %p49 = scmp.eq.s32.totalorder %s48, 0
      %s51 = sadd.s32 %s50, 1
      %s52 = scalar_select %p49, %s50, %s51
      %p55 = pneg %p49
      %p56 = scmp.eq.s32.totalorder %s28, 7
      %p57 = por %p55, %p56
      %p58 = scmp.ne.s32.totalorder %s50, %s53
      %p59 = scmp.eq.s32.totalorder %s28, 0
      %p60 = por %p58, %p59
      %p61 = scmp.ne.s32.totalorder %s50, %s53
      %p62 = scmp.eq.s32.totalorder %s33, 7
      %p63 = por %p61, %p62
      %p64 = scmp.ne.s32.totalorder %s53, %s54
      %p65 = scmp.eq.s32.totalorder %s33, 0
      %p66 = por %p64, %p65
      %p67 = scmp.ne.s32.totalorder %s53, %s54
      %p68 = scmp.eq.s32.totalorder %s34, 7
      %p69 = por %p67, %p68
      %p71 = scmp.ne.s32.totalorder %s54, %s70
      %p72 = scmp.eq.s32.totalorder %s34, 0
      %p73 = por %p71, %p72
      %s74 = ssub.s32 %s36, %s43
      %p75 = scmp.eq.s32.totalorder %s74, 0
      %s77 = sadd.s32 %s76, 1
      %s78 = scalar_select %p75, %s76, %s77
      %p81 = pneg %p75
      %p82 = scmp.eq.s32.totalorder %s28, 7
      %p83 = por %p81, %p82
      %p84 = scmp.ne.s32.totalorder %s76, %s79
      %p85 = scmp.eq.s32.totalorder %s28, 0
      %p86 = por %p84, %p85
      %p87 = scmp.ne.s32.totalorder %s76, %s79
      %p88 = scmp.eq.s32.totalorder %s33, 7
      %p89 = por %p87, %p88
      %p90 = scmp.ne.s32.totalorder %s79, %s80
      %p91 = scmp.eq.s32.totalorder %s33, 0
      %p92 = por %p90, %p91
      %p93 = scmp.ne.s32.totalorder %s79, %s80
      %p94 = scmp.eq.s32.totalorder %s34, 7
      %p95 = por %p93, %p94
      %p97 = scmp.ne.s32.totalorder %s80, %s96
      %p98 = scmp.eq.s32.totalorder %s34, 0
      %p99 = por %p97, %p98
      %s100 = ssub.s32 %s36, %s43
      %p101 = scmp.eq.s32.totalorder %s100, 0
      %s103 = sadd.s32 %s102, 1
      %s104 = scalar_select %p101, %s102, %s103
      %p107 = pneg %p101
      %p108 = scmp.eq.s32.totalorder %s28, 7
      %p109 = por %p107, %p108
      %p110 = scmp.ne.s32.totalorder %s102, %s105
      %p111 = scmp.eq.s32.totalorder %s28, 0
      %p112 = por %p110, %p111
      %p113 = scmp.ne.s32.totalorder %s102, %s105
      %p114 = scmp.eq.s32.totalorder %s33, 7
      %p115 = por %p113, %p114
      %p116 = scmp.ne.s32.totalorder %s105, %s106
      %p117 = scmp.eq.s32.totalorder %s33, 0
      %p118 = por %p116, %p117
      %p119 = scmp.ne.s32.totalorder %s105, %s106
      %p120 = scmp.eq.s32.totalorder %s34, 7
      %p121 = por %p119, %p120
      %p123 = scmp.ne.s32.totalorder %s106, %s122
      %p124 = scmp.eq.s32.totalorder %s34, 0
      %p125 = por %p123, %p124
      %s126 = ssub.s32 %s36, %s43
      %p127 = scmp.eq.s32.totalorder %s126, 0
      %s129 = sadd.s32 %s128, 1
      %s130 = scalar_select %p127, %s128, %s129
      %p133 = pneg %p127
      %p134 = scmp.eq.s32.totalorder %s28, 7
      %p135 = por %p133, %p134
      %p136 = scmp.ne.s32.totalorder %s128, %s131
      %p137 = scmp.eq.s32.totalorder %s28, 0
      %p138 = por %p136, %p137
      %p139 = scmp.ne.s32.totalorder %s128, %s131
      %p140 = scmp.eq.s32.totalorder %s33, 7
      %p141 = por %p139, %p140
      %p142 = scmp.ne.s32.totalorder %s131, %s132
      %p143 = scmp.eq.s32.totalorder %s33, 0
      %p144 = por %p142, %p143
      %p145 = scmp.ne.s32.totalorder %s131, %s132
      %p146 = scmp.eq.s32.totalorder %s34, 7
      %p147 = por %p145, %p146
      %p149 = scmp.ne.s32.totalorder %s132, %s148
      %p150 = scmp.eq.s32.totalorder %s34, 0
      %p151 = por %p149, %p150
      %s153 = sadd.s32 %s152, 1
      %p156 = scmp.eq.s32.totalorder %s28, 7
      %p157 = scmp.ne.s32.totalorder %s152, %s154
      %p158 = scmp.eq.s32.totalorder %s28, 0
      %p159 = por %p157, %p158
      %p160 = scmp.ne.s32.totalorder %s152, %s154
      %p161 = scmp.eq.s32.totalorder %s33, 7
      %p162 = por %p160, %p161
      %p163 = scmp.ne.s32.totalorder %s154, %s155
      %p164 = scmp.eq.s32.totalorder %s33, 0
      %p165 = por %p163, %p164
      %p166 = scmp.ne.s32.totalorder %s154, %s155
      %p167 = scmp.eq.s32.totalorder %s34, 7
      %p168 = por %p166, %p167
      %p170 = scmp.ne.s32.totalorder %s155, %s169
      %p171 = scmp.eq.s32.totalorder %s34, 0
      %p172 = por %p170, %p171
      %s174 = sadd.s32 %s173, 1
      %p177 = scmp.eq.s32.totalorder %s28, 7
      %p178 = scmp.ne.s32.totalorder %s173, %s175
      %p179 = scmp.eq.s32.totalorder %s28, 0
      %p180 = por %p178, %p179
      %p181 = scmp.ne.s32.totalorder %s173, %s175
      %p182 = scmp.eq.s32.totalorder %s33, 7
      %p183 = por %p181, %p182
      %p184 = scmp.ne.s32.totalorder %s175, %s176
      %p185 = scmp.eq.s32.totalorder %s33, 0
      %p186 = por %p184, %p185
      %p187 = scmp.ne.s32.totalorder %s175, %s176
      %p188 = scmp.eq.s32.totalorder %s34, 7
      %p189 = por %p187, %p188
      %p191 = scmp.ne.s32.totalorder %s176, %s190
      %p192 = scmp.eq.s32.totalorder %s34, 0
      %p193 = por %p191, %p192
      %s195 = sadd.s32 %s194, 1
      %p198 = scmp.eq.s32.totalorder %s28, 7
      %p199 = scmp.ne.s32.totalorder %s194, %s196
      %p200 = scmp.eq.s32.totalorder %s28, 0
      %p201 = por %p199, %p200
      %p202 = scmp.ne.s32.totalorder %s194, %s196
      %p203 = scmp.eq.s32.totalorder %s33, 7
      %p204 = por %p202, %p203
      %p205 = scmp.ne.s32.totalorder %s196, %s197
      %p206 = scmp.eq.s32.totalorder %s33, 0
      %p207 = por %p205, %p206
      %p208 = scmp.ne.s32.totalorder %s196, %s197
      %p209 = scmp.eq.s32.totalorder %s34, 7
      %p210 = por %p208, %p209
      %p212 = scmp.ne.s32.totalorder %s197, %s211
      %p213 = scmp.eq.s32.totalorder %s34, 0
      %p214 = por %p212, %p213
      %s216 = sadd.s32 %s215, 1
      %p219 = scmp.eq.s32.totalorder %s28, 7
      %p220 = scmp.ne.s32.totalorder %s215, %s217
      %p221 = scmp.eq.s32.totalorder %s28, 0
      %p222 = por %p220, %p221
      %p223 = scmp.ne.s32.totalorder %s215, %s217
      %p224 = scmp.eq.s32.totalorder %s33, 7
      %p225 = por %p223, %p224
      %p226 = scmp.ne.s32.totalorder %s217, %s218
      %p227 = scmp.eq.s32.totalorder %s33, 0
      %p228 = por %p226, %p227
      %p229 = scmp.ne.s32.totalorder %s217, %s218
      %p230 = scmp.eq.s32.totalorder %s34, 7
      %p231 = por %p229, %p230
      %p233 = scmp.ne.s32.totalorder %s218, %s232
      %p234 = scmp.eq.s32.totalorder %s34, 0
      %p235 = por %p233, %p234
      %s237 = sadd.s32 %s236, 1
      %p240 = scmp.eq.s32.totalorder %s28, 7
      %p241 = scmp.ne.s32.totalorder %s236, %s238
      %p242 = scmp.eq.s32.totalorder %s28, 0
      %p243 = por %p241, %p242
      %p244 = scmp.ne.s32.totalorder %s236, %s238
      %p245 = scmp.eq.s32.totalorder %s33, 7
      %p246 = por %p244, %p245
      %p247 = scmp.ne.s32.totalorder %s238, %s239
      %p248 = scmp.eq.s32.totalorder %s33, 0
      %p249 = por %p247, %p248
      %p250 = scmp.ne.s32.totalorder %s238, %s239
      %p251 = scmp.eq.s32.totalorder %s34, 7
      %p252 = por %p250, %p251
      %p254 = scmp.ne.s32.totalorder %s239, %s253
      %p255 = scmp.eq.s32.totalorder %s34, 0
      %p256 = por %p254, %p255
      %s258 = sadd.s32 %s257, 1
      %p261 = scmp.eq.s32.totalorder %s28, 7
      %p262 = scmp.ne.s32.totalorder %s257, %s259
      %p263 = scmp.eq.s32.totalorder %s28, 0
      %p264 = por %p262, %p263
      %p265 = scmp.ne.s32.totalorder %s257, %s259
      %p266 = scmp.eq.s32.totalorder %s33, 7
      %p267 = por %p265, %p266
      %p268 = scmp.ne.s32.totalorder %s259, %s260
      %p269 = scmp.eq.s32.totalorder %s33, 0
      %p270 = por %p268, %p269
      %p271 = scmp.ne.s32.totalorder %s259, %s260
      %p272 = scmp.eq.s32.totalorder %s34, 7
      %p273 = por %p271, %p272
      %p275 = scmp.ne.s32.totalorder %s260, %s274
      %p276 = scmp.eq.s32.totalorder %s34, 0
      %p277 = por %p275, %p276
      %s279 = sadd.s32 %s278, 1
      %p282 = scmp.eq.s32.totalorder %s28, 7
      %p283 = scmp.ne.s32.totalorder %s278, %s280
      %p284 = scmp.eq.s32.totalorder %s28, 0
      %p285 = por %p283, %p284
      %p286 = scmp.ne.s32.totalorder %s278, %s280
      %p287 = scmp.eq.s32.totalorder %s33, 7
      %p288 = por %p286, %p287
      %p289 = scmp.ne.s32.totalorder %s280, %s281
      %p290 = scmp.eq.s32.totalorder %s33, 0
      %p291 = por %p289, %p290
      %p292 = scmp.ne.s32.totalorder %s280, %s281
      %p293 = scmp.eq.s32.totalorder %s34, 7
      %p294 = por %p292, %p293
      %p296 = scmp.ne.s32.totalorder %s281, %s295
      %p297 = scmp.eq.s32.totalorder %s34, 0
      %p298 = por %p296, %p297
      %s300 = sadd.s32 %s299, 1
      %p303 = scmp.eq.s32.totalorder %s28, 7
      %p304 = scmp.ne.s32.totalorder %s299, %s301
      %p305 = scmp.eq.s32.totalorder %s28, 0
      %p306 = por %p304, %p305
      %p307 = scmp.ne.s32.totalorder %s299, %s301
      %p308 = scmp.eq.s32.totalorder %s33, 7
      %p309 = por %p307, %p308
      %p310 = scmp.ne.s32.totalorder %s301, %s302
      %p311 = scmp.eq.s32.totalorder %s33, 0
      %p312 = por %p310, %p311
      %p313 = scmp.ne.s32.totalorder %s301, %s302
      %p314 = scmp.eq.s32.totalorder %s34, 7
      %p315 = por %p313, %p314
      %p317 = scmp.ne.s32.totalorder %s302, %s316
      %p318 = scmp.eq.s32.totalorder %s34, 0
      %p319 = por %p317, %p318
      %s321 = sadd.s32 %s320, 1
      %p324 = scmp.eq.s32.totalorder %s28, 7
      %p325 = scmp.ne.s32.totalorder %s320, %s322
      %p326 = scmp.eq.s32.totalorder %s28, 0
      %p327 = por %p325, %p326
      %p328 = scmp.ne.s32.totalorder %s320, %s322
      %p329 = scmp.eq.s32.totalorder %s33, 7
      %p330 = por %p328, %p329
      %p331 = scmp.ne.s32.totalorder %s322, %s323
      %p332 = scmp.eq.s32.totalorder %s33, 0
      %p333 = por %p331, %p332
      %p334 = scmp.ne.s32.totalorder %s322, %s323
      %p335 = scmp.eq.s32.totalorder %s34, 7
      %p336 = por %p334, %p335
      %p338 = scmp.ne.s32.totalorder %s323, %s337
      %p339 = scmp.eq.s32.totalorder %s34, 0
      %p340 = por %p338, %p339
      %s341 = ssub.s32 %s35, %s47
      %p342 = scmp.eq.s32.totalorder %s341, 0
      %s344 = sadd.s32 %s343, 1
      %s345 = scalar_select %p342, %s343, %s344
      %p348 = pneg %p342
      %p349 = scmp.eq.s32.totalorder %s28, 7
      %p350 = por %p348, %p349
      %p351 = scmp.ne.s32.totalorder %s343, %s346
      %p352 = scmp.eq.s32.totalorder %s28, 0
      %p353 = por %p351, %p352
      %p354 = scmp.ne.s32.totalorder %s343, %s346
      %p355 = scmp.eq.s32.totalorder %s33, 7
      %p356 = por %p354, %p355
      %p357 = scmp.ne.s32.totalorder %s346, %s347
      %p358 = scmp.eq.s32.totalorder %s33, 0
      %p359 = por %p357, %p358
      %p360 = scmp.ne.s32.totalorder %s346, %s347
      %p361 = scmp.eq.s32.totalorder %s34, 7
      %p362 = por %p360, %p361
      %p364 = scmp.ne.s32.totalorder %s347, %s363
      %p365 = scmp.eq.s32.totalorder %s34, 0
      %p366 = por %p364, %p365
      %s367 = ssub.s32 %s35, %s47
      %p368 = scmp.eq.s32.totalorder %s367, 0
      %s370 = sadd.s32 %s369, 1
      %s371 = scalar_select %p368, %s369, %s370
      %p374 = pneg %p368
      %p375 = scmp.eq.s32.totalorder %s28, 7
      %p376 = por %p374, %p375
      %p377 = scmp.ne.s32.totalorder %s369, %s372
      %p378 = scmp.eq.s32.totalorder %s28, 0
      %p379 = por %p377, %p378
      %p380 = scmp.ne.s32.totalorder %s369, %s372
      %p381 = scmp.eq.s32.totalorder %s33, 7
      %p382 = por %p380, %p381
      %p383 = scmp.ne.s32.totalorder %s372, %s373
      %p384 = scmp.eq.s32.totalorder %s33, 0
      %p385 = por %p383, %p384
      %p386 = scmp.ne.s32.totalorder %s372, %s373
      %p387 = scmp.eq.s32.totalorder %s34, 7
      %p388 = por %p386, %p387
      %p390 = scmp.ne.s32.totalorder %s373, %s389
      %p391 = scmp.eq.s32.totalorder %s34, 0
      %p392 = por %p390, %p391
      %s393 = ssub.s32 %s35, %s47
      %p394 = scmp.eq.s32.totalorder %s393, 0
      %s396 = sadd.s32 %s395, 1
      %s397 = scalar_select %p394, %s395, %s396
      %p400 = pneg %p394
      %p401 = scmp.eq.s32.totalorder %s28, 7
      %p402 = por %p400, %p401
      %p403 = scmp.ne.s32.totalorder %s395, %s398
      %p404 = scmp.eq.s32.totalorder %s28, 0
      %p405 = por %p403, %p404
      %p406 = scmp.ne.s32.totalorder %s395, %s398
      %p407 = scmp.eq.s32.totalorder %s33, 7
      %p408 = por %p406, %p407
      %p409 = scmp.ne.s32.totalorder %s398, %s399
      %p410 = scmp.eq.s32.totalorder %s33, 0
      %p411 = por %p409, %p410
      %p412 = scmp.ne.s32.totalorder %s398, %s399
      %p413 = scmp.eq.s32.totalorder %s34, 7
      %p414 = por %p412, %p413
      %p416 = scmp.ne.s32.totalorder %s399, %s415
      %p417 = scmp.eq.s32.totalorder %s34, 0
      %p418 = por %p416, %p417
      %p419 = scmp.le.s32.totalorder 1, %s28
      %p420 = scmp.lt.s32.totalorder %s28, 9
      %p421 = pnand %p419, %p420
      %p422 = pneg %p421
      // Predicated region
      $region9: #{tpu_custom_call.1} parent=5 // pred_check
        _
      $region10: #{tpu_custom_call.1} parent=5 // pred_check_branch
        %424 = sbr.rel (%p421) target = $region12
      $region11: #{tpu_custom_call.1} parent=5 // pred_region
        %s425 = ssub.s32 %s28, 1
        // Predicated region
        $region13: #{tpu_custom_call.1} parent=11 // pred_check
          %p426 = pneg %p165
        $region14: #{tpu_custom_call.1} parent=11 // pred_check_branch
          %428 = sbr.rel (%p426) target = $region16
        $region15: #{tpu_custom_call.1} parent=11 // pred_region
          _
        $region16: #{tpu_custom_call.1} parent=11 // pred_fallthru
          _
        // Predicated region
        $region17: #{tpu_custom_call.1} parent=11 // pred_check
          %p429 = pneg %p186
        $region18: #{tpu_custom_call.1} parent=11 // pred_check_branch
          %431 = sbr.rel (%p429) target = $region20
        $region19: #{tpu_custom_call.1} parent=11 // pred_region
          _
        $region20: #{tpu_custom_call.1} parent=11 // pred_fallthru
          _
        // Predicated region
        $region21: #{tpu_custom_call.1} parent=11 // pred_check
          %p432 = pneg %p207
        $region22: #{tpu_custom_call.1} parent=11 // pred_check_branch
          %434 = sbr.rel (%p432) target = $region24
        $region23: #{tpu_custom_call.1} parent=11 // pred_region
          _
        $region24: #{tpu_custom_call.1} parent=11 // pred_fallthru
          _
        // Predicated region
        $region25: #{tpu_custom_call.1} parent=11 // pred_check
          %p435 = pneg %p228
        $region26: #{tpu_custom_call.1} parent=11 // pred_check_branch
          %437 = sbr.rel (%p435) target = $region28
        $region27: #{tpu_custom_call.1} parent=11 // pred_region
          _
        $region28: #{tpu_custom_call.1} parent=11 // pred_fallthru
          _
        // Predicated region
        $region29: #{tpu_custom_call.1} parent=11 // pred_check
          %p438 = pneg %p249
        $region30: #{tpu_custom_call.1} parent=11 // pred_check_branch
          %440 = sbr.rel (%p438) target = $region32
        $region31: #{tpu_custom_call.1} parent=11 // pred_region
          _
        $region32: #{tpu_custom_call.1} parent=11 // pred_fallthru
          _
        // Predicated region
        $region33: #{tpu_custom_call.1} parent=11 // pred_check
          %p441 = pneg %p270
        $region34: #{tpu_custom_call.1} parent=11 // pred_check_branch
          %443 = sbr.rel (%p441) target = $region36
        $region35: #{tpu_custom_call.1} parent=11 // pred_region
          _
        $region36: #{tpu_custom_call.1} parent=11 // pred_fallthru
          _
        // Predicated region
        $region37: #{tpu_custom_call.1} parent=11 // pred_check
          %p444 = pneg %p291
        $region38: #{tpu_custom_call.1} parent=11 // pred_check_branch
          %446 = sbr.rel (%p444) target = $region40
        $region39: #{tpu_custom_call.1} parent=11 // pred_region
          _
        $region40: #{tpu_custom_call.1} parent=11 // pred_fallthru
          _
        // Predicated region
        $region41: #{tpu_custom_call.1} parent=11 // pred_check
          %p447 = pneg %p312
        $region42: #{tpu_custom_call.1} parent=11 // pred_check_branch
          %449 = sbr.rel (%p447) target = $region44
        $region43: #{tpu_custom_call.1} parent=11 // pred_region
          _
        $region44: #{tpu_custom_call.1} parent=11 // pred_fallthru
          _
        // Predicated region
        $region45: #{tpu_custom_call.1} parent=11 // pred_check
          %p450 = pneg %p333
        $region46: #{tpu_custom_call.1} parent=11 // pred_check_branch
          %452 = sbr.rel (%p450) target = $region48
        $region47: #{tpu_custom_call.1} parent=11 // pred_region
          _
        $region48: #{tpu_custom_call.1} parent=11 // pred_fallthru
          _
      $region12: #{tpu_custom_call.1} parent=5 // pred_fallthru
        _
      %p453 = scmp.lt.s32.totalorder %s28, 8
      // Predicated region
      $region49: #{tpu_custom_call.1} parent=5 // pred_check
        %p454 = pneg %p453
      $region50: #{tpu_custom_call.1} parent=5 // pred_check_branch
        %456 = sbr.rel (%p454) target = $region52
      $region51: #{tpu_custom_call.1} parent=5 // pred_region
        // Predicated region
        $region53: #{tpu_custom_call.1} parent=51 // pred_check
          %p457 = pneg %p60
        $region54: #{tpu_custom_call.1} parent=51 // pred_check_branch
          %459 = sbr.rel (%p457) target = $region56
        $region55: #{tpu_custom_call.1} parent=51 // pred_region
          %p460 = scmp.lt.s32.totalorder %s35, 1
          %s461 = scalar_select %p460, %s35, 1
          %s462 = smul.addr %s461, 8
          %s463 = scalar_lea.vmem %s0, %s462
        $region56: #{tpu_custom_call.1} parent=51 // pred_fallthru
          _
        // Predicated region
        $region57: #{tpu_custom_call.1} parent=51 // pred_check
          %p464 = pneg %p86
        $region58: #{tpu_custom_call.1} parent=51 // pred_check_branch
          %466 = sbr.rel (%p464) target = $region60
        $region59: #{tpu_custom_call.1} parent=51 // pred_region
          %s467 = sand.u32 %s76, 1
          %s468 = sand.u32 %s76, 1
          %s469 = smul.addr %s468, 64
          %s470 = scalar_lea.vmem [#allocation3], %s469
          %s471 = smul.u32 2, %s36
          %s472 = smul.addr %s471, 8
          %s473 = scalar_lea.vmem %s1, %s472
          // Predicated region
          $region61: #{tpu_custom_call.1} parent=59 // pred_check
            _
          $region62: #{tpu_custom_call.1} parent=59 // pred_check_branch
            %475 = sbr.rel (0) target = $region64
          $region63: #{tpu_custom_call.1} parent=59 // pred_region
            // Predicated region
            $region65: #{tpu_custom_call.1} parent=63 // pred_check
              _
            $region66: #{tpu_custom_call.1} parent=63 // pred_check_branch
              %477 = sbr.rel (0) target = $region68
            $region67: #{tpu_custom_call.1} parent=63 // pred_region
              loop: start=0, step=1, limit=1
              $region69: #{tpu_custom_call.1} parent=67 // loop_pre_header
                _
              $region70: #{tpu_custom_call.1} parent=67 // loop_header
                %s479 = sphi 0, %s483
                %p480 = scmp.ge.s32.totalorder %s479, 1
                %s484 = sphi %s473, %s473
                %s485 = sphi %s470, %s470
              $region71: #{tpu_custom_call.1} parent=67 // loop_header_branch
                %482 = sbr.rel (%p480) target = $region75
              $region72: #{tpu_custom_call.1} parent=67 // loop_body
                %v486 = vld [vmem:[%s484] sm:$0xff]
                %487 = vst [vmem:[%s485] sm:$0xff] %v486
                %v488 = vld [vmem:[%s484 + $0x8] sm:$0xff]
                %489 = vst [vmem:[%s485 + $0x8] sm:$0xff] %v488
                %v490 = vld [vmem:[%s484 + $0x40] sm:$0xff]
                %491 = vst [vmem:[%s485 + $0x10] sm:$0xff] %v490
                %v492 = vld [vmem:[%s484 + $0x48] sm:$0xff]
                %493 = vst [vmem:[%s485 + $0x18] sm:$0xff] %v492
                %v494 = vld [vmem:[%s484 + $0x80] sm:$0xff]
                %495 = vst [vmem:[%s485 + $0x20] sm:$0xff] %v494
                %v496 = vld [vmem:[%s484 + $0x88] sm:$0xff]
                %497 = vst [vmem:[%s485 + $0x28] sm:$0xff] %v496
                %v498 = vld [vmem:[%s484 + $0xc0] sm:$0xff]
                %499 = vst [vmem:[%s485 + $0x30] sm:$0xff] %v498
                %v500 = vld [vmem:[%s484 + $0xc8] sm:$0xff]
                %501 = vst [vmem:[%s485 + $0x38] sm:$0xff] %v500
              $region73: #{tpu_custom_call.1} parent=67 // loop_footer
                %s483 = sadd.s32 1, %s479
              $region74: #{tpu_custom_call.1} parent=67 // loop_footer_branch
                %478 = sbr.rel target = $region70
              $region75: #{tpu_custom_call.1} parent=67 // loop_exit
                _
            $region68: #{tpu_custom_call.1} parent=63 // pred_fallthru
              _
            // Predicated region
            $region76: #{tpu_custom_call.1} parent=63 // pred_check
              _
            $region77: #{tpu_custom_call.1} parent=63 // pred_check_branch
              %503 = sbr.rel target = $region79
            $region78: #{tpu_custom_call.1} parent=63 // pred_region
              _
            $region79: #{tpu_custom_call.1} parent=63 // pred_fallthru
              _
          $region64: #{tpu_custom_call.1} parent=59 // pred_fallthru
            _
          %504 = vnop
        $region60: #{tpu_custom_call.1} parent=51 // pred_fallthru
          _
        // Predicated region
        $region80: #{tpu_custom_call.1} parent=51 // pred_check
          %p505 = pneg %p112
        $region81: #{tpu_custom_call.1} parent=51 // pred_check_branch
          %507 = sbr.rel (%p505) target = $region83
        $region82: #{tpu_custom_call.1} parent=51 // pred_region
          %s508 = smul.u32 2, %s36
          %p509 = scmp.lt.s32.totalorder %s508, 7
          %s510 = scalar_select %p509, %s508, 7
          %s511 = scalar_lea.vmem %s2, %s510
          %s512 = smul.u32 2, %s36
        $region83: #{tpu_custom_call.1} parent=51 // pred_fallthru
          _
        // Predicated region
        $region84: #{tpu_custom_call.1} parent=51 // pred_check
          %p513 = pneg %p138
        $region85: #{tpu_custom_call.1} parent=51 // pred_check_branch
          %515 = sbr.rel (%p513) target = $region87
        $region86: #{tpu_custom_call.1} parent=51 // pred_region
          %s516 = smul.u32 32, %s36
          %p517 = scmp.lt.s32.totalorder %s516, 127
          %s518 = scalar_select %p517, %s516, 127
          %s519 = smul.addr %s518, 8
          %s520 = scalar_lea.vmem %s3, %s519
          %s521 = smul.u32 32, %s36
        $region87: #{tpu_custom_call.1} parent=51 // pred_fallthru
          _
      $region52: #{tpu_custom_call.1} parent=5 // pred_fallthru
        _
      %p522 = scmp.le.s32.totalorder 1, %s28
      %p523 = scmp.lt.s32.totalorder %s28, 9
      %p524 = pnand %p522, %p523
      %p525 = pneg %p524
      // Predicated region
      $region88: #{tpu_custom_call.1} parent=5 // pred_check
        _
      $region89: #{tpu_custom_call.1} parent=5 // pred_check_branch
        %527 = sbr.rel (%p524) target = $region91
      $region90: #{tpu_custom_call.1} parent=5 // pred_region
        %s528 = ssub.s32 %s28, 1
        %s529 = sand.u32 %s79, 1
        %s530 = sand.u32 %s79, 1
        %s531 = smul.addr %s530, 64
        %s532 = scalar_lea.vmem [#allocation3], %s531
        // Predicated region
        $region92: #{tpu_custom_call.1} parent=90 // pred_check
          %p533 = pneg %p92
        $region93: #{tpu_custom_call.1} parent=90 // pred_check_branch
          %535 = sbr.rel (%p533) target = $region95
        $region94: #{tpu_custom_call.1} parent=90 // pred_region
          _
        $region95: #{tpu_custom_call.1} parent=90 // pred_fallthru
          _
        %p536 = scmp.lt.s32.totalorder %s37, 1
        %s537 = scalar_select %p536, %s37, 1
        %s538 = smul.addr %s537, 8
        %s539 = scalar_lea.vmem %s0, %s538
        %p540 = pneg %p66
        %p541 = pneg %p63
        %s542 = sand.u32 %s79, 1
        %s543 = sand.u32 %s79, 1
        %s544 = smul.addr %s543, 64
        %s545 = scalar_lea.vmem [#allocation3], %s544
        %p546 = pneg %p92
        %p547 = pneg %p89
        %s548 = smul.u32 2, %s38
        %p549 = scmp.lt.s32.totalorder %s548, 7
        %s550 = scalar_select %p549, %s548, 7
        %s551 = scalar_lea.vmem %s2, %s550
        %p552 = pneg %p118
        %p553 = pneg %p115
        %s554 = smul.u32 32, %s38
        %p555 = scmp.lt.s32.totalorder %s554, 127
        %s556 = scalar_select %p555, %s554, 127
        %s557 = smul.addr %s556, 8
        %s558 = scalar_lea.vmem %s3, %s557
        %p559 = pneg %p144
        %p560 = pneg %p141
        %p561 = pneg %p165
        %p562 = pneg %p162
        %p563 = pneg %p186
        %p564 = pneg %p183
        %p565 = pneg %p207
        %p566 = pneg %p204
        %p567 = pneg %p228
        %p568 = pneg %p225
        %p569 = pneg %p249
        %p570 = pneg %p246
        %p571 = pneg %p270
        %p572 = pneg %p267
        %p573 = pneg %p291
        %p574 = pneg %p288
        %p575 = pneg %p312
        %p576 = pneg %p309
        %p577 = pneg %p333
        %p578 = pneg %p330
        %p579 = pneg %p359
        %p580 = pneg %p356
        %s581 = sand.u32 %s346, 1
        %s582 = scalar_lea.sflag [#allocation5], %s581
        %s583 = sand.u32 %s346, 1
        %s584 = smul.addr %s583, 8
        %s585 = scalar_lea.vmem [#allocation4], %s584
        %p586 = pneg %p385
        %p587 = pneg %p382
        %s588 = sand.u32 %s372, 1
        %s589 = scalar_lea.sflag [#allocation7], %s588
        %s590 = sand.u32 %s372, 1
        %s591 = smul.addr %s590, 8
        %s592 = scalar_lea.vmem [#allocation6], %s591
        %p593 = pneg %p411
        %p594 = pneg %p408
        %p595 = scmp.lt.s32.totalorder %s37, 1
        %s596 = scalar_select %p595, %s37, 1
        %s597 = smul.addr %s596, 8
        %s598 = scalar_lea.vmem %s15, %s597
        %p599 = scmp.lt.s32.totalorder %s37, 1
        %s600 = scalar_select %p599, %s37, 1
        %s601 = smul.addr %s600, 8
        %s602 = scalar_lea.vmem %s0, %s601
        %s603 = smul.u32 2, %s38
        %s604 = smul.u32 2, %s38
        %p605 = scmp.lt.s32.totalorder %s604, 7
        %s606 = scalar_select %p605, %s604, 7
        %s607 = scalar_lea.vmem %s2, %s606
        %s608 = smul.u32 2, %s38
        %s609 = smul.u32 32, %s38
        %p610 = scmp.lt.s32.totalorder %s609, 127
        %s611 = scalar_select %p610, %s609, 127
        %s612 = smul.addr %s611, 8
        %s613 = scalar_lea.vmem %s3, %s612
        %s614 = smul.u32 32, %s38
        %p615 = scmp.lt.s32.totalorder %s37, 1
        %s616 = scalar_select %p615, %s37, 1
        %s617 = smul.addr %s616, 8
        %s618 = scalar_lea.vmem %s15, %s617
        %p619 = scmp.eq.s32.totalorder %s38, 0
        // Predicated region
        $region96: #{tpu_custom_call.1} parent=90 // pred_check
          %p620 = pneg %p619
        $region97: #{tpu_custom_call.1} parent=90 // pred_check_branch
          %622 = sbr.rel (%p620) target = $region99
        $region98: #{tpu_custom_call.1} parent=90 // pred_region
          %vm623 = vcmask 261120
          %624 = vst.msk [vmem:[#allocation2] sm:$0xff] %vm623, 0.0
        $region99: #{tpu_custom_call.1} parent=90 // pred_fallthru
          _
        %v625 = vld [vmem:[%s602] sm:$0xff]
        %v626 = vld [vmem:[%s532] sm:$0xff]
        %v627 = vld [vmem:[%s532 + $0x8] sm:$0xff]
        %v628 = vld [vmem:[%s532 + $0x10] sm:$0xff]
        %v629 = vld [vmem:[%s532 + $0x18] sm:$0xff]
        %v630 = vld [vmem:[%s532 + $0x20] sm:$0xff]
        %v631 = vld [vmem:[%s532 + $0x28] sm:$0xff]
        %v632 = vld [vmem:[%s532 + $0x30] sm:$0xff]
        %v633 = vld [vmem:[%s532 + $0x38] sm:$0xff]
        %v634 = vld [vmem:[%s607] sm:$0x3]
        %v636 = vlaneseq
        %v637 = vshrl.u32 %v636, 7
        %v638 = vsub.s32 0, %v637
        %v639 = vrot.slane %v634, %v638
        %v640 = vlaneseq
        %v641 = vshrl.u32 %v640, 7
        %v642 = vsub.s32 1, %v641
        %v643 = vrot.slane %v634, %v642
        %vm646 = vcmask 261120
        %v648 = vsel %vm646, %v625, 0
        %650 = vmatprep.subr.mxu0 0.0
        %651 = vmatpush1.msra.mxu0 0.0
        %652 = vmatprep.subr.mxu0 0.0
        %653 = vmatpush1.msra.mxu0 0.0
        %654 = vmatprep.subr.mxu0 0.0
        %655 = vmatpush1.msra.mxu0 0.0
        %656 = vmatprep.subr.mxu0 0.0
        %657 = vmatpush1.msra.mxu0 0.0
        %658 = vmatprep.subr.mxu0 0.0
        %659 = vmatpush1.msra.mxu0 0.0
        %660 = vmatprep.subr.mxu0 0.0
        %661 = vmatpush1.msra.mxu0 0.0
        %662 = vmatprep.subr.mxu0 0.0
        %663 = vmatpush1.msra.mxu0 0.0
        %664 = vmatprep.subr.mxu0 0.0
        %665 = vmatpush1.msra.mxu0 0.0
        %666 = vmatprep.subr.mxu0 0.0
        %667 = vmatpush1.msra.mxu0 0.0
        %668 = vmatprep.subr.mxu0 0.0
        %669 = vmatpush1.msra.mxu0 0.0
        %670 = vmatprep.subr.mxu0 0.0
        %671 = vmatpush1.msra.mxu0 0.0
        %672 = vmatprep.subr.mxu0 0.0
        %673 = vmatpush1.msra.mxu0 0.0
        %674 = vmatprep.subr.mxu0 %v633
        %675 = vmatpush1.msra.mxu0 %v632
        %676 = vmatprep.subr.mxu0 %v631
        %677 = vmatpush1.msra.mxu0 %v630
        %678 = vmatprep.subr.mxu0 %v629
        %679 = vmatpush1.msra.mxu0 %v628
        %680 = vmatprep.subr.mxu0 %v627
        %681 = vmatpush1.msra.mxu0 %v626
        %682 = vmatprep.subr.mxu0 0.0
        %683 = vmatpush2.msra.mxu0 0.0
        %684 = vmatprep.subr.mxu0 0.0
        %685 = vmatpush2.msra.mxu0 0.0
        %686 = vmatprep.subr.mxu0 0.0
        %687 = vmatpush2.msra.mxu0 0.0
        %688 = vmatprep.subr.mxu0 0.0
        %689 = vmatpush2.msra.mxu0 0.0
        %690 = vmatprep.subr.mxu0 0.0
        %691 = vmatpush2.msra.mxu0 0.0
        %692 = vmatprep.subr.mxu0 0.0
        %693 = vmatpush2.msra.mxu0 0.0
        %694 = vmatprep.subr.mxu0 0.0
        %695 = vmatpush2.msra.mxu0 0.0
        %696 = vmatprep.subr.mxu0 0.0
        %697 = vmatpush2.msra.mxu0 0.0
        %698 = vmatprep.subr.mxu0 0.0
        %699 = vmatpush2.msra.mxu0 0.0
        %700 = vmatprep.subr.mxu0 0.0
        %701 = vmatpush2.msra.mxu0 0.0
        %702 = vmatprep.subr.mxu0 0.0
        %703 = vmatpush2.msra.mxu0 0.0
        %704 = vmatprep.subr.mxu0 0.0
        %705 = vmatpush2.msra.mxu0 0.0
        %706 = vmatprep.subr.mxu0 0.0
        %707 = vmatpush2.msra.mxu0 0.0
        %708 = vmatprep.subr.mxu0 0.0
        %709 = vmatpush2.msra.mxu0 0.0
        %710 = vmatprep.subr.mxu0 0.0
        %711 = vmatpush2.msra.mxu0 0.0
        %712 = vmatprep.subr.mxu0 0.0
        %713 = vmatpush2.msra.mxu0 0.0
        %714 = vmatprep.mubr.f32.mxu0 0.0
        %715 = vmatmul.mubr.f32.gmra.mxu0 %v648
        %v716 = vpop.f32.mrf.mxu0
        %v717 = vadd.f32 %v639, %v716
        %v718 = vpop.f32.mrf.mxu0
        %v719 = vadd.f32 %v643, %v718
        %720 = vdwg.mxu0
        %v721 = vmul.f32 %v717, 0.5
        %v722 = vmul.f32 %v719, 0.5
        %v723 = vmul.f32 %v717, 0.044715
        %v724 = vmul.f32 %v719, 0.044715
        %v725 = vmul.f32 %v723, %v717
        %v726 = vmul.f32 %v724, %v719
        %v727 = vmul.f32 %v725, %v717
        %v728 = vmul.f32 %v726, %v719
        %v729 = vadd.f32 %v717, %v727
        %v730 = vadd.f32 %v719, %v728
        %v731 = vmul.f32 %v729, 0.7978846
        %v732 = vmul.f32 %v730, 0.7978846
        %v733 = vtanh.pop %v731
        %v734 = vtanh.pop %v732
        %v735 = vadd.f32 %v733, 1.0
        %v736 = vadd.f32 %v734, 1.0
        %v737 = vmul.f32 %v721, %v735
        %v738 = vmul.f32 %v722, %v736
        %v739 = vld [vmem:[#allocation2] sm:$0xff]
        %v740 = vld [vmem:[%s613] sm:$0xff]
        %v741 = vld [vmem:[%s613 + $0x8] sm:$0xff]
        %v742 = vld [vmem:[%s613 + $0x10] sm:$0xff]
        %v743 = vld [vmem:[%s613 + $0x18] sm:$0xff]
        %v744 = vld [vmem:[%s613 + $0x20] sm:$0xff]
        %v745 = vld [vmem:[%s613 + $0x28] sm:$0xff]
        %v746 = vld [vmem:[%s613 + $0x30] sm:$0xff]
        %v747 = vld [vmem:[%s613 + $0x38] sm:$0xff]
        %v748 = vld [vmem:[%s613 + $0x40] sm:$0xff]
        %v749 = vld [vmem:[%s613 + $0x48] sm:$0xff]
        %v750 = vld [vmem:[%s613 + $0x50] sm:$0xff]
        %v751 = vld [vmem:[%s613 + $0x58] sm:$0xff]
        %v752 = vld [vmem:[%s613 + $0x60] sm:$0xff]
        %v753 = vld [vmem:[%s613 + $0x68] sm:$0xff]
        %v754 = vld [vmem:[%s613 + $0x70] sm:$0xff]
        %v755 = vld [vmem:[%s613 + $0x78] sm:$0xff]
        %v756 = vld [vmem:[%s613 + $0x80] sm:$0xff]
        %v757 = vld [vmem:[%s613 + $0x88] sm:$0xff]
        %v758 = vld [vmem:[%s613 + $0x90] sm:$0xff]
        %v759 = vld [vmem:[%s613 + $0x98] sm:$0xff]
        %v760 = vld [vmem:[%s613 + $0xa0] sm:$0xff]
        %v761 = vld [vmem:[%s613 + $0xa8] sm:$0xff]
        %v762 = vld [vmem:[%s613 + $0xb0] sm:$0xff]
        %v763 = vld [vmem:[%s613 + $0xb8] sm:$0xff]
        %v764 = vld [vmem:[%s613 + $0xc0] sm:$0xff]
        %v765 = vld [vmem:[%s613 + $0xc8] sm:$0xff]
        %v766 = vld [vmem:[%s613 + $0xd0] sm:$0xff]
        %v767 = vld [vmem:[%s613 + $0xd8] sm:$0xff]
        %v768 = vld [vmem:[%s613 + $0xe0] sm:$0xff]
        %v769 = vld [vmem:[%s613 + $0xe8] sm:$0xff]
        %v770 = vld [vmem:[%s613 + $0xf0] sm:$0xff]
        %v771 = vld [vmem:[%s613 + $0xf8] sm:$0xff]
        %772 = vmatprep.subr.mxu0 0.0
        %773 = vmatpush1.msra.mxu0 %v755
        %774 = vmatprep.subr.mxu0 0.0
        %775 = vmatpush1.msra.mxu0 %v754
        %776 = vmatprep.subr.mxu0 0.0
        %777 = vmatpush1.msra.mxu0 %v753
        %778 = vmatprep.subr.mxu0 0.0
        %779 = vmatpush1.msra.mxu0 %v752
        %780 = vmatprep.subr.mxu0 0.0
        %781 = vmatpush1.msra.mxu0 %v751
        %782 = vmatprep.subr.mxu0 0.0
        %783 = vmatpush1.msra.mxu0 %v750
        %784 = vmatprep.subr.mxu0 0.0
        %785 = vmatpush1.msra.mxu0 %v749
        %786 = vmatprep.subr.mxu0 0.0
        %787 = vmatpush1.msra.mxu0 %v748
        %788 = vmatprep.subr.mxu0 0.0
        %789 = vmatpush1.msra.mxu0 %v747
        %790 = vmatprep.subr.mxu0 0.0
        %791 = vmatpush1.msra.mxu0 %v746
        %792 = vmatprep.subr.mxu0 0.0
        %793 = vmatpush1.msra.mxu0 %v745
        %794 = vmatprep.subr.mxu0 0.0
        %795 = vmatpush1.msra.mxu0 %v744
        %796 = vmatprep.subr.mxu0 0.0
        %797 = vmatpush1.msra.mxu0 %v743
        %798 = vmatprep.subr.mxu0 0.0
        %799 = vmatpush1.msra.mxu0 %v742
        %800 = vmatprep.subr.mxu0 0.0
        %801 = vmatpush1.msra.mxu0 %v741
        %802 = vmatprep.subr.mxu0 0.0
        %803 = vmatpush1.msra.mxu0 %v740
        %804 = vmatprep.subr.mxu0 0.0
        %805 = vmatpush2.msra.mxu0 %v771
        %806 = vmatprep.subr.mxu0 0.0
        %807 = vmatpush2.msra.mxu0 %v770
        %808 = vmatprep.subr.mxu0 0.0
        %809 = vmatpush2.msra.mxu0 %v769
        %810 = vmatprep.subr.mxu0 0.0
        %811 = vmatpush2.msra.mxu0 %v768
        %812 = vmatprep.subr.mxu0 0.0
        %813 = vmatpush2.msra.mxu0 %v767
        %814 = vmatprep.subr.mxu0 0.0
        %815 = vmatpush2.msra.mxu0 %v766
        %816 = vmatprep.subr.mxu0 0.0
        %817 = vmatpush2.msra.mxu0 %v765
        %818 = vmatprep.subr.mxu0 0.0
        %819 = vmatpush2.msra.mxu0 %v764
        %820 = vmatprep.subr.mxu0 0.0
        %821 = vmatpush2.msra.mxu0 %v763
        %822 = vmatprep.subr.mxu0 0.0
        %823 = vmatpush2.msra.mxu0 %v762
        %824 = vmatprep.subr.mxu0 0.0
        %825 = vmatpush2.msra.mxu0 %v761
        %826 = vmatprep.subr.mxu0 0.0
        %827 = vmatpush2.msra.mxu0 %v760
        %828 = vmatprep.subr.mxu0 0.0
        %829 = vmatpush2.msra.mxu0 %v759
        %830 = vmatprep.subr.mxu0 0.0
        %831 = vmatpush2.msra.mxu0 %v758
        %832 = vmatprep.subr.mxu0 0.0
        %833 = vmatpush2.msra.mxu0 %v757
        %834 = vmatprep.subr.mxu0 0.0
        %835 = vmatpush2.msra.mxu0 %v756
        %836 = vmatprep.mubr.f32.mxu0 %v738
        %837 = vmatmul.mubr.f32.gmra.mxu0 %v737
        %v838 = vpop.f32.mrf.mxu0
        %v839 = vadd.f32 0.0, %v838
        %v840 = vpop.f32.mrf.mxu0
        %841 = vdwg.mxu0
        %v842 = vadd.f32 %v739, %v839
        %843 = vst.msk [vmem:[#allocation2] sm:$0xff] %vm646, %v842
        %p844 = scmp.eq.s32.totalorder %s38, 3
        // Predicated region
        $region100: #{tpu_custom_call.1} parent=90 // pred_check
          %p845 = pneg %p844
        $region101: #{tpu_custom_call.1} parent=90 // pred_check_branch
          %847 = sbr.rel (%p845) target = $region103
        $region102: #{tpu_custom_call.1} parent=90 // pred_region
          %v848 = vld [vmem:[#allocation2] sm:$0xff]
          %v849 = vld [vmem:[%s4] sm:$0x1]
          %v851 = vlaneseq
          %v852 = vshrl.u32 %v851, 7
          %v853 = vsub.s32 0, %v852
          %v854 = vrot.slane %v849, %v853
          %v856 = vadd.f32 %v848, %v854
          %857 = vst.msk [vmem:[%s585] sm:$0xff] %vm646, %v856
          %v858 = vld [vmem:[%s5] sm:$0x7]
          %v859 = vlaneseq
          %v860 = vshrl.u32 %v859, 7
          %v861 = vsub.s32 0, %v860
          %v862 = vrot.slane %v858, %v861
          %vm863 = vcmp.gt.f32.partialorder %v856, %v862
          %v864 = vsel %vm863, 1, 0
          %v865 = vcvt.s32.f32 %v864
          %v866 = vadd.f32 %v865, 0.0
          %v867 = vlaneseq
          %v868 = vshrl.u32 %v867, 7
          %v869 = vsub.s32 1, %v868
          %v870 = vrot.slane %v858, %v869
          %vm871 = vcmp.gt.f32.partialorder %v856, %v870
          %v872 = vsel %vm871, 1, 0
          %v873 = vcvt.s32.f32 %v872
          %v874 = vadd.f32 %v866, %v873
          %v875 = vlaneseq
          %v876 = vshrl.u32 %v875, 7
          %v877 = vsub.s32 2, %v876
          %v878 = vrot.slane %v858, %v877
          %vm879 = vcmp.gt.f32.partialorder %v856, %v878
          %v880 = vsel %vm879, 1, 0
          %v881 = vcvt.s32.f32 %v880
          %v882 = vadd.f32 %v874, %v881
          %v883 = vld [vmem:[%s6] sm:$0x3]
          %v884 = vlaneseq
          %v885 = vshrl.u32 %v884, 7
          %v886 = vsub.s32 0, %v885
          %v887 = vrot.slane %v883, %v886
          %889 = vrot.lane.b32.xlu0 %v887, 8
          %v890 = vpop.permute.xlu0 %889
          %vm892 = vcmp.gt.f32.partialorder %v856, %v890
          %v893 = vsel %vm892, 1, 0
          %v894 = vcvt.s32.f32 %v893
          %v895 = vadd.f32 %v894, 0.0
          %v896 = vlaneseq
          %v897 = vshrl.u32 %v896, 7
          %v898 = vsub.s32 1, %v897
          %v899 = vrot.slane %v883, %v898
          %901 = vrot.lane.b32.xlu0 %v899, 8
          %v902 = vpop.permute.xlu0 %901
          %vm904 = vcmp.gt.f32.partialorder %v856, %v902
          %v905 = vsel %vm904, 1, 0
          %v906 = vcvt.s32.f32 %v905
          %v907 = vadd.f32 %v895, %v906
          %v908 = vld [vmem:[%s7] sm:$0x1]
          %v910 = vlaneseq
          %v911 = vshrl.u32 %v910, 7
          %v912 = vsub.s32 0, %v911
          %v913 = vrot.slane %v908, %v912
          %914 = vrot.lane.b32.xlu0 %v913, 16
          %v915 = vpop.permute.xlu0 %914
          %vm917 = vcmp.gt.f32.partialorder %v856, %v915
          %v918 = vsel %vm917, 1, 0
          %v919 = vcvt.s32.f32 %v918
          %v920 = vld [vmem:[%s8] sm:$0xff]
          %v921 = vld [vmem:[%s9] sm:$0x1]
          %v923 = vlaneseq
          %v924 = vshrl.u32 %v923, 7
          %v925 = vsub.s32 0, %v924
          %v926 = vrot.slane %v921, %v925
          %929 = vrot.lane.b32.xlu0 %v856, 104
          %v930 = vpop.permute.xlu0 %929
          %vm931 = vcmask 64512
          %v932 = vsel %vm931, %v930, 0
          %934 = vmatprep.subr.mxu0 0.0
          %935 = vmatpush1.msra.mxu0 0.0
          %936 = vmatprep.subr.mxu0 0.0
          %937 = vmatpush1.msra.mxu0 0.0
          %938 = vmatprep.subr.mxu0 0.0
          %939 = vmatpush1.msra.mxu0 0.0
          %940 = vmatprep.subr.mxu0 0.0
          %941 = vmatpush1.msra.mxu0 0.0
          %942 = vmatprep.subr.mxu0 0.0
          %943 = vmatpush1.msra.mxu0 0.0
          %944 = vmatprep.subr.mxu0 0.0
          %945 = vmatpush1.msra.mxu0 0.0
          %946 = vmatprep.subr.mxu0 0.0
          %947 = vmatpush1.msra.mxu0 0.0
          %948 = vmatprep.subr.mxu0 0.0
          %949 = vmatpush1.msra.mxu0 0.0
          %950 = vmatprep.subr.mxu0 0.0
          %951 = vmatpush1.msra.mxu0 0.0
          %952 = vmatprep.subr.mxu0 0.0
          %953 = vmatpush1.msra.mxu0 0.0
          %954 = vmatprep.subr.mxu0 0.0
          %955 = vmatpush1.msra.mxu0 0.0
          %956 = vmatprep.subr.mxu0 0.0
          %957 = vmatpush1.msra.mxu0 0.0
          %958 = vmatprep.subr.mxu0 0.0
          %959 = vmatpush1.msra.mxu0 0.0
          %960 = vmatprep.subr.mxu0 0.0
          %961 = vmatpush1.msra.mxu0 0.0
          %962 = vmatprep.subr.mxu0 0.0
          %963 = vmatpush1.msra.mxu0 0.0
          %964 = vmatprep.subr.mxu0 0.0
          %965 = vmatpush1.msra.mxu0 %v920
          %966 = vmatprep.subr.mxu0 0.0
          %967 = vmatpush2.msra.mxu0 0.0
          %968 = vmatprep.subr.mxu0 0.0
          %969 = vmatpush2.msra.mxu0 0.0
          %970 = vmatprep.subr.mxu0 0.0
          %971 = vmatpush2.msra.mxu0 0.0
          %972 = vmatprep.subr.mxu0 0.0
          %973 = vmatpush2.msra.mxu0 0.0
          %974 = vmatprep.subr.mxu0 0.0
          %975 = vmatpush2.msra.mxu0 0.0
          %976 = vmatprep.subr.mxu0 0.0
          %977 = vmatpush2.msra.mxu0 0.0
          %978 = vmatprep.subr.mxu0 0.0
          %979 = vmatpush2.msra.mxu0 0.0
          %980 = vmatprep.subr.mxu0 0.0
          %981 = vmatpush2.msra.mxu0 0.0
          %982 = vmatprep.subr.mxu0 0.0
          %983 = vmatpush2.msra.mxu0 0.0
          %984 = vmatprep.subr.mxu0 0.0
          %985 = vmatpush2.msra.mxu0 0.0
          %986 = vmatprep.subr.mxu0 0.0
          %987 = vmatpush2.msra.mxu0 0.0
          %988 = vmatprep.subr.mxu0 0.0
          %989 = vmatpush2.msra.mxu0 0.0
          %990 = vmatprep.subr.mxu0 0.0
          %991 = vmatpush2.msra.mxu0 0.0
          %992 = vmatprep.subr.mxu0 0.0
          %993 = vmatpush2.msra.mxu0 0.0
          %994 = vmatprep.subr.mxu0 0.0
          %995 = vmatpush2.msra.mxu0 0.0
          %996 = vmatprep.subr.mxu0 0.0
          %997 = vmatpush2.msra.mxu0 0.0
          %998 = vmatprep.mubr.f32.mxu0 0.0
          %999 = vmatmul.mubr.f32.gmra.mxu0 %v932
          %v1000 = vpop.f32.mrf.mxu0
          %v1001 = vadd.f32 %v926, %v1000
          %v1002 = vpop.f32.mrf.mxu0
          %1003 = vdwg.mxu0
          %v1004 = vmul.f32 %v1001, 0.5
          %v1005 = vmul.f32 %v1001, 0.044715
          %v1006 = vmul.f32 %v1005, %v1001
          %v1007 = vmul.f32 %v1006, %v1001
          %v1008 = vadd.f32 %v1001, %v1007
          %v1009 = vmul.f32 %v1008, 0.7978846
          %v1010 = vtanh.pop %v1009
          %v1011 = vadd.f32 %v1010, 1.0
          %v1012 = vmul.f32 %v1004, %v1011
          %v1013 = vld [vmem:[%s10] sm:$0xf]
          %v1014 = vld [vmem:[%s11] sm:$0x1]
          %v1016 = vlaneseq
          %v1017 = vshrl.u32 %v1016, 7
          %v1018 = vsub.s32 0, %v1017
          %v1019 = vrot.slane %v1014, %v1018
          %vm1021 = vcmask 31744
          %v1023 = vsel %vm1021, %v1012, 0
          %vm1025 = vcmask 1043456
          %v1027 = vsel %vm1025, %v1013, 0
          %1029 = vmatprep.subr.mxu0 0.0
          %1030 = vmatpush1.msra.mxu0 0.0
          %1031 = vmatprep.subr.mxu0 0.0
          %1032 = vmatpush1.msra.mxu0 0.0
          %1033 = vmatprep.subr.mxu0 0.0
          %1034 = vmatpush1.msra.mxu0 0.0
          %1035 = vmatprep.subr.mxu0 0.0
          %1036 = vmatpush1.msra.mxu0 0.0
          %1037 = vmatprep.subr.mxu0 0.0
          %1038 = vmatpush1.msra.mxu0 0.0
          %1039 = vmatprep.subr.mxu0 0.0
          %1040 = vmatpush1.msra.mxu0 0.0
          %1041 = vmatprep.subr.mxu0 0.0
          %1042 = vmatpush1.msra.mxu0 0.0
          %1043 = vmatprep.subr.mxu0 0.0
          %1044 = vmatpush1.msra.mxu0 0.0
          %1045 = vmatprep.subr.mxu0 0.0
          %1046 = vmatpush1.msra.mxu0 0.0
          %1047 = vmatprep.subr.mxu0 0.0
          %1048 = vmatpush1.msra.mxu0 0.0
          %1049 = vmatprep.subr.mxu0 0.0
          %1050 = vmatpush1.msra.mxu0 0.0
          %1051 = vmatprep.subr.mxu0 0.0
          %1052 = vmatpush1.msra.mxu0 0.0
          %1053 = vmatprep.subr.mxu0 0.0
          %1054 = vmatpush1.msra.mxu0 0.0
          %1055 = vmatprep.subr.mxu0 0.0
          %1056 = vmatpush1.msra.mxu0 0.0
          %1057 = vmatprep.subr.mxu0 0.0
          %1058 = vmatpush1.msra.mxu0 0.0
          %1059 = vmatprep.subr.mxu0 0.0
          %1060 = vmatpush1.msra.mxu0 %v1027
          %1061 = vmatprep.subr.mxu0 0.0
          %1062 = vmatpush2.msra.mxu0 0.0
          %1063 = vmatprep.subr.mxu0 0.0
          %1064 = vmatpush2.msra.mxu0 0.0
          %1065 = vmatprep.subr.mxu0 0.0
          %1066 = vmatpush2.msra.mxu0 0.0
          %1067 = vmatprep.subr.mxu0 0.0
          %1068 = vmatpush2.msra.mxu0 0.0
          %1069 = vmatprep.subr.mxu0 0.0
          %1070 = vmatpush2.msra.mxu0 0.0
          %1071 = vmatprep.subr.mxu0 0.0
          %1072 = vmatpush2.msra.mxu0 0.0
          %1073 = vmatprep.subr.mxu0 0.0
          %1074 = vmatpush2.msra.mxu0 0.0
          %1075 = vmatprep.subr.mxu0 0.0
          %1076 = vmatpush2.msra.mxu0 0.0
          %1077 = vmatprep.subr.mxu0 0.0
          %1078 = vmatpush2.msra.mxu0 0.0
          %1079 = vmatprep.subr.mxu0 0.0
          %1080 = vmatpush2.msra.mxu0 0.0
          %1081 = vmatprep.subr.mxu0 0.0
          %1082 = vmatpush2.msra.mxu0 0.0
          %1083 = vmatprep.subr.mxu0 0.0
          %1084 = vmatpush2.msra.mxu0 0.0
          %1085 = vmatprep.subr.mxu0 0.0
          %1086 = vmatpush2.msra.mxu0 0.0
          %1087 = vmatprep.subr.mxu0 0.0
          %1088 = vmatpush2.msra.mxu0 0.0
          %1089 = vmatprep.subr.mxu0 0.0
          %1090 = vmatpush2.msra.mxu0 0.0
          %1091 = vmatprep.subr.mxu0 0.0
          %1092 = vmatpush2.msra.mxu0 0.0
          %1093 = vmatprep.mubr.f32.mxu0 0.0
          %1094 = vmatmul.mubr.f32.gmra.mxu0 %v1023
          %v1095 = vpop.f32.mrf.mxu0
          %v1096 = vadd.f32 %v1019, %v1095
          %v1097 = vpop.f32.mrf.mxu0
          %1098 = vdwg.mxu0
          %1099 = vst.msk [vmem:[%s618] sm:$0xff] %vm1021, %v1096
          %v1100 = vld [vmem:[%s12] sm:$0x1]
          %v1102 = vlaneseq
          %v1103 = vshrl.u32 %v1102, 7
          %v1104 = vsub.s32 0, %v1103
          %v1105 = vrot.slane %v1100, %v1104
          %vm1107 = vcmp.gt.f32.partialorder %v1096, %v1105
          %v1108 = vsel %vm1107, 1, 0
          %v1109 = vcvt.s32.f32 %v1108
          %1111 = vrot.lane.b32.xlu0 %v1109, 24
          %v1112 = vpop.permute.xlu0 %1111
          %v1114 = vsel %vm931, %v882, %v907
          %vm1115 = vcmask 130048
          %v1116 = vsel %vm1115, %v1114, %v919
          %vm1117 = vcmask 195584
          %v1118 = vsel %vm1117, %v1116, %v1112
          %vm1119 = vcmask 228352
          %1120 = vst.msk [vmem:[%s592] sm:$0xff] %vm1119, %v1118
        $region103: #{tpu_custom_call.1} parent=90 // pred_fallthru
          _
        %s1121 = sand.u32 %s346, 1
        %s1122 = scalar_lea.sflag [#allocation5], %s1121
        %s1123 = sand.u32 %s346, 1
        %s1124 = smul.addr %s1123, 8
        %s1125 = scalar_lea.vmem [#allocation4], %s1124
        %s1126 = sand.u32 %s372, 1
        %s1127 = scalar_lea.sflag [#allocation7], %s1126
        %s1128 = sand.u32 %s372, 1
        %s1129 = smul.addr %s1128, 8
        %s1130 = scalar_lea.vmem [#allocation6], %s1129
        %p1131 = scmp.lt.s32.totalorder %s37, 1
        %s1132 = scalar_select %p1131, %s37, 1
        %s1133 = smul.addr %s1132, 8
        %s1134 = scalar_lea.vmem %s15, %s1133
        // Predicated region
        $region104: #{tpu_custom_call.1} parent=90 // pred_check
          %p1135 = pneg %p356
        $region105: #{tpu_custom_call.1} parent=90 // pred_check_branch
          %1137 = sbr.rel (%p1135) target = $region107
        $region106: #{tpu_custom_call.1} parent=90 // pred_region
          %s1139 = ssub.s32 128, 128
          %1140 = vsyncadd %s1122, %s1139
          %s1141 = smul.addr %s37, 128
          %s1142 = scalar_lea.hbm %s13, %s1141
          %s1144 = sshll.u32 %s1125, 4
          %s1145 = int_to_ptr.vmem [resolvable:$true] %s1144
          %1147 = dma.vmem_to_hbm [thread:$0]  %s1145, 128, %s1142, %s1122
        $region107: #{tpu_custom_call.1} parent=90 // pred_fallthru
          _
        // Predicated region
        $region108: #{tpu_custom_call.1} parent=90 // pred_check
          %p1148 = pneg %p382
        $region109: #{tpu_custom_call.1} parent=90 // pred_check_branch
          %1150 = sbr.rel (%p1148) target = $region111
        $region110: #{tpu_custom_call.1} parent=90 // pred_region
          %s1152 = ssub.s32 128, 128
          %1153 = vsyncadd %s1127, %s1152
          %s1154 = smul.addr %s37, 128
          %s1155 = scalar_lea.hbm %s14, %s1154
          %s1157 = sshll.u32 %s1130, 4
          %s1158 = int_to_ptr.vmem [resolvable:$true] %s1157
          %1160 = dma.vmem_to_hbm [thread:$0]  %s1158, 128, %s1155, %s1127
        $region111: #{tpu_custom_call.1} parent=90 // pred_fallthru
          _
        // Predicated region
        $region112: #{tpu_custom_call.1} parent=90 // pred_check
          %p1161 = pneg %p408
        $region113: #{tpu_custom_call.1} parent=90 // pred_check_branch
          %1163 = sbr.rel (%p1161) target = $region115
        $region114: #{tpu_custom_call.1} parent=90 // pred_region
          _
        $region115: #{tpu_custom_call.1} parent=90 // pred_fallthru
          _
      $region91: #{tpu_custom_call.1} parent=5 // pred_fallthru
        _
      %p1164 = scmp.le.s32.totalorder 2, %s28
      // Predicated region
      $region116: #{tpu_custom_call.1} parent=5 // pred_check
        %p1165 = pneg %p1164
      $region117: #{tpu_custom_call.1} parent=5 // pred_check_branch
        %1167 = sbr.rel (%p1165) target = $region119
      $region118: #{tpu_custom_call.1} parent=5 // pred_region
        %s1168 = ssub.s32 %s28, 2
        // Predicated region
        $region120: #{tpu_custom_call.1} parent=118 // pred_check
          %p1169 = pneg %p362
        $region121: #{tpu_custom_call.1} parent=118 // pred_check_branch
          %1171 = sbr.rel (%p1169) target = $region123
        $region122: #{tpu_custom_call.1} parent=118 // pred_region
          %s1172 = sand.u32 %s347, 1
          %s1173 = scalar_lea.sflag [#allocation5], %s1172
          %s1174 = sand.u32 %s347, 1
          %s1175 = smul.addr %s1174, 8
          %s1176 = scalar_lea.vmem [#allocation4], %s1175
          %1177 = dma.done %s1173, 128
        $region123: #{tpu_custom_call.1} parent=118 // pred_fallthru
          _
        // Predicated region
        $region124: #{tpu_custom_call.1} parent=118 // pred_check
          %p1178 = pneg %p388
        $region125: #{tpu_custom_call.1} parent=118 // pred_check_branch
          %1180 = sbr.rel (%p1178) target = $region127
        $region126: #{tpu_custom_call.1} parent=118 // pred_region
          %s1181 = sand.u32 %s373, 1
          %s1182 = scalar_lea.sflag [#allocation7], %s1181
          %s1183 = sand.u32 %s373, 1
          %s1184 = smul.addr %s1183, 8
          %s1185 = scalar_lea.vmem [#allocation6], %s1184
          %1186 = dma.done %s1182, 128
        $region127: #{tpu_custom_call.1} parent=118 // pred_fallthru
          _
        // Predicated region
        $region128: #{tpu_custom_call.1} parent=118 // pred_check
          %p1187 = pneg %p414
        $region129: #{tpu_custom_call.1} parent=118 // pred_check_branch
          %1189 = sbr.rel (%p1187) target = $region131
        $region130: #{tpu_custom_call.1} parent=118 // pred_region
          %p1190 = scmp.lt.s32.totalorder %s39, 1
          %s1191 = scalar_select %p1190, %s39, 1
          %s1192 = smul.addr %s1191, 8
          %s1193 = scalar_lea.vmem %s15, %s1192
        $region131: #{tpu_custom_call.1} parent=118 // pred_fallthru
          _
      $region119: #{tpu_custom_call.1} parent=5 // pred_fallthru
        _
    $region6: #{tpu_custom_call.1} parent=1 // loop_footer
      %s32 = sadd.s32 1, %s28
    $region7: #{tpu_custom_call.1} parent=1 // loop_footer_branch
      %27 = sbr.rel target = $region3
    $region8: #{tpu_custom_call.1} parent=1 // loop_exit
      _
    %1194 = vsyncpa [#allocation5], 1
    %s1195 = scalar_lea.sflag [#allocation5], 1
    %1196 = vsyncpa %s1195, 1
    %1197 = vsyncpa [#allocation7], 1
    %s1198 = scalar_lea.sflag [#allocation7], 1
    %1199 = vsyncpa %s1198, 1

</llo_original>
